<compile_context>
chip_gen: v7x
topology: tpu7x:2x2x1
jax: 0.10.0
libtpu: 0.0.40
codegen_flags: <defaults>
</compile_context>

<pallas_src>
import math
import functools

import jax
import jax.numpy as jnp
from jax import lax
from jax.experimental import pallas as pl
from jax.experimental.pallas import tpu as pltpu


# -----------------------------------------------------------------------------
# Pallas kernel: one (batch, q-tile) step; all heads handled inside the kernel.
# -----------------------------------------------------------------------------
def _tisas_attn_kernel(mask_ref, padb_ref, q_ref, k_ref, v_ref, tk_ref, tv_ref,
                       *out_refs, n_heads, head_dim, inv_scale, with_attn):
    o_ref = out_refs[0]
    aw_ref = out_refs[1] if with_attn else None

    # Upcast-on-load (cheap VPU filler under the DMA); matmuls keep bf16
    # operands and accumulate in f32 on the MXU.
    qf = q_ref[0].astype(jnp.float32) * inv_scale     # [Tq, D]  (1/sqrt(hd) folded)
    qb = qf.astype(jnp.bfloat16)                      # bf16 copy for MXU dots
    k_all = k_ref[0]                                  # [Lk, D]      bf16
    v_all = v_ref[0]                                  # [Lk, D]      bf16
    tk_all = tk_ref[0]                                # [Tq, Lk, D]  bf16
    tv_all = tv_ref[0]                                # [Tq, Lk, D]  bf16

    # combined additive bias: attention mask + per-batch padding bias
    bias = mask_ref[...] + padb_ref[0]                # [Tq, Lk] f32

    head_outs = []
    for h in range(n_heads):                          # unrolled at trace time
        lo = h * head_dim
        hi = lo + head_dim
        q_h = qb[:, lo:hi]                            # [Tq, hd] bf16 (scaled)
        qf_h = qf[:, lo:hi]                           # [Tq, hd] f32  (scaled)
        k_h = k_all[:, lo:hi]                         # [Lk, hd] bf16
        v_h = v_all[:, lo:hi]                         # [Lk, hd] bf16
        tk_h = tk_all[:, :, lo:hi]                    # [Tq, Lk, hd] bf16
        tv_h = tv_all[:, :, lo:hi]                    # [Tq, Lk, hd] bf16

        # energy = (Q K^T + sum_d time_K * Q) / sqrt(hd)  (scale already in Q)
        energy = lax.dot_general(
            q_h, k_h, (((1,), (1,)), ((), ())),
            preferred_element_type=jnp.float32)       # [Tq, Lk]  (MXU, bf16)
        # TODO(synk): try a batched dot_general to move this contraction onto
        # the MXU; the elementwise-multiply + lane-reduce form runs on VPU/XLU.
        energy = energy + jnp.sum(tk_h * qf_h[:, None, :], axis=-1)
        energy = energy + bias

        # numerically stable softmax; reciprocal on the EUP + 1 Newton step
        m = jnp.max(energy, axis=-1, keepdims=True)
        e = jnp.exp(energy - m)
        s = jnp.sum(e, axis=-1, keepdims=True)
        r = pl.reciprocal(s, approx=True)
        r = r * (2.0 - s * r)                         # Newton refinement
        aw = e * r                                    # [Tq, Lk] f32

        if with_attn:
            aw_ref[0, h] = aw.astype(aw_ref.dtype)

        p = aw.astype(jnp.bfloat16)
        out_h = jnp.dot(p, v_h, preferred_element_type=jnp.float32)  # [Tq, hd]
        out_h = out_h + jnp.sum(aw[:, :, None] * tv_h, axis=1)
        head_outs.append(out_h)

    # single lane-dense [Tq, d_model] store (no masked partial stores)
    o_ref[0] = jnp.concatenate(head_outs, axis=-1).astype(o_ref.dtype)


# -----------------------------------------------------------------------------
# Tile sizing: keep double-buffered blocks under a v7x-safe VMEM budget.
# -----------------------------------------------------------------------------
def _q_tile_and_vmem(Lq, Lk, D, n_heads, return_attn,
                     budget_bytes=44 * 1024 * 1024):
    def step_bytes(tq):
        b = 2 * 2 * tq * Lk * D * 2            # time_K + time_V blocks (bf16, x2 buffers)
        b += 2 * 2 * Lk * D * 2                # K + V blocks
        b += 2 * tq * D * 2                    # Q block
        b += 2 * tq * Lk * 4 + 2 * Lk * 4      # attn-mask + pad-bias blocks
        b += 2 * tq * D * 4                    # O block
        if return_attn:
            b += 2 * n_heads * tq * Lk * 4     # attention-weights block
        return b

    cands = sorted({d for d in range(1, Lq + 1)
                    if Lq % d == 0 and (d % 8 == 0 or d == Lq)}, reverse=True)
    tq = cands[-1]
    for c in cands:
        if step_bytes(c) <= budget_bytes:
            tq = c
            break
    vmem_limit = int(min(64 * 1024 * 1024,
                         max(32 * 1024 * 1024, 2 * step_bytes(tq))))
    return tq, vmem_limit


# -----------------------------------------------------------------------------
# Pallas wrapper: time-aware scaled dot-product attention.
# -----------------------------------------------------------------------------
def time_aware_attention(Qp, Kp, Vp, time_K, time_V, attn_mask, pad_bias,
                         *, n_heads, return_attn=True, q_tile=None):
    """Qp/Kp/Vp: [B, L, d_model] bf16;  time_K/time_V: [B, Lq, Lk, d_model] bf16;
    attn_mask: [Lq, Lk] f32 additive;  pad_bias: [B, 1, Lk] f32 additive."""
    B, Lq, D = Qp.shape
    Lk = Kp.shape[1]
    head_dim = D // n_heads

    tq, vmem_limit = _q_tile_and_vmem(Lq, Lk, D, n_heads, return_attn)
    if q_tile is not None:
        tq = q_tile
    n_q = Lq // tq

    kernel = functools.partial(
        _tisas_attn_kernel, n_heads=n_heads, head_dim=head_dim,
        inv_scale=1.0 / math.sqrt(head_dim), with_attn=return_attn)

    out_shape = [jax.ShapeDtypeStruct((B, Lq, D), jnp.float32)]
    out_specs = [pl.BlockSpec((1, tq, D), lambda b, qi: (b, qi, 0))]
    if return_attn:
        out_shape.append(jax.ShapeDtypeStruct((B, n_heads, Lq, Lk), jnp.float32))
        out_specs.append(
            pl.BlockSpec((1, n_heads, tq, Lk), lambda b, qi: (b, 0, qi, 0)))

    grid_spec = pltpu.PrefetchScalarGridSpec(
        num_scalar_prefetch=0,
        grid=(B, n_q),
        in_specs=[
            pl.BlockSpec((tq, Lk), lambda b, qi: (qi, 0)),              # attn mask
            pl.BlockSpec((1, 1, Lk), lambda b, qi: (b, 0, 0)),          # pad bias
            pl.BlockSpec((1, tq, D), lambda b, qi: (b, qi, 0)),         # Q
            pl.BlockSpec((1, Lk, D), lambda b, qi: (b, 0, 0)),          # K
            pl.BlockSpec((1, Lk, D), lambda b, qi: (b, 0, 0)),          # V
            pl.BlockSpec((1, tq, Lk, D), lambda b, qi: (b, qi, 0, 0)),  # time_K
            pl.BlockSpec((1, tq, Lk, D), lambda b, qi: (b, qi, 0, 0)),  # time_V
        ],
        out_specs=out_specs,
    )

    outs = pl.pallas_call(
        kernel,
        out_shape=tuple(out_shape),
        grid_spec=grid_spec,
        compiler_params=pltpu.CompilerParams(
            dimension_semantics=("parallel", "parallel"),
            vmem_limit_bytes=vmem_limit),
    )(attn_mask, pad_bias, Qp, Kp, Vp, time_K, time_V)

    if return_attn:
        return outs[0], outs[1]
    return outs[0], None


# -----------------------------------------------------------------------------
# Full module: TimeAwareMultiHeadedAttention
# -----------------------------------------------------------------------------
def init_params(key, d_model):
    ks = jax.random.split(key, 8)
    s = 1.0 / math.sqrt(d_model)
    def lin(kw, kb):
        W = jax.random.uniform(kw, (d_model, d_model), jnp.float32, -s, s)
        b = jax.random.uniform(kb, (d_model,), jnp.float32, -s, s)
        return W, b
    return {
        "fc_q": lin(ks[0], ks[1]),
        "fc_k": lin(ks[2], ks[3]),
        "fc_v": lin(ks[4], ks[5]),
        "fc_o": lin(ks[6], ks[7]),
    }


def _linear(x, Wb):
    W, b = Wb
    return x @ W.T + b   # matches torch nn.Linear (y = x W^T + b)


def time_aware_mha(params, Q, K, V, time_matrix_K, time_matrix_V,
                   padding_mask=None, attn_mask=None, *, n_heads,
                   return_attn=True):
    """Q/K/V: [B, L, d_model]; time_matrix_K/V: [B, Lq, Lk, d_model];
    padding_mask: [B, Lk] (1 = mask); attn_mask: [Lq, Lk] additive."""
    B, Lq, d_model = Q.shape
    Lk = K.shape[1]

    Qp = _linear(Q, params["fc_q"]).astype(jnp.bfloat16)
    Kp = _linear(K, params["fc_k"]).astype(jnp.bfloat16)
    Vp = _linear(V, params["fc_v"]).astype(jnp.bfloat16)

    # Time tensors stay in native [B, Lq, Lk, d_model] layout — no head-split
    # transpose.  (In a real model the time-interval embeddings would already
    # be produced in bf16, avoiding even this cast pass.)
    tK = time_matrix_K if time_matrix_K.dtype == jnp.bfloat16 \
        else time_matrix_K.astype(jnp.bfloat16)
    tV = time_matrix_V if time_matrix_V.dtype == jnp.bfloat16 \
        else time_matrix_V.astype(jnp.bfloat16)

    if attn_mask is None:
        attn_mask_f = jnp.zeros((Lq, Lk), jnp.float32)
    else:
        attn_mask_f = attn_mask.astype(jnp.float32)
    if padding_mask is None:
        pad_bias = jnp.zeros((B, 1, Lk), jnp.float32)
    else:
        pad_bias = jnp.where(padding_mask.reshape(B, 1, Lk) != 0,
                             jnp.float32(-2.0 ** 32 + 1.0), jnp.float32(0.0))

    # TODO(synk): dropout on attention weights / output omitted (inference).
    O, attn = time_aware_attention(Qp, Kp, Vp, tK, tV, attn_mask_f, pad_bias,
                                   n_heads=n_heads, return_attn=return_attn)

    O = _linear(O, params["fc_o"])   # O already [B, Lq, d_model]: no transpose
    return O, attn


# -----------------------------------------------------------------------------
# Plain-JAX f32 reference (mirrors the PyTorch module) for validation.
# -----------------------------------------------------------------------------
def reference_mha(params, Q, K, V, tK, tV, padding_mask, attn_mask, n_heads):
    B, Lq, D = Q.shape
    Lk = K.shape[1]
    hd = D // n_heads
    Qp = _linear(Q, params["fc_q"]).reshape(B, Lq, n_heads, hd).transpose(0, 2, 1, 3)
    Kp = _linear(K, params["fc_k"]).reshape(B, Lk, n_heads, hd).transpose(0, 2, 1, 3)
    Vp = _linear(V, params["fc_v"]).reshape(B, Lk, n_heads, hd).transpose(0, 2, 1, 3)
    tKh = tK.reshape(B, Lq, Lk, n_heads, hd).transpose(0, 3, 1, 2, 4)
    tVh = tV.reshape(B, Lq, Lk, n_heads, hd).transpose(0, 3, 1, 2, 4)
    scale = math.sqrt(hd)
    energy = jnp.einsum('bhqd,bhkd->bhqk', Qp, Kp)
    energy = energy + jnp.einsum('bhqkd,bhqd->bhqk', tKh, Qp)
    energy = energy / scale
    if attn_mask is not None:
        energy = energy + attn_mask[None, None]
    if padding_mask is not None:
        energy = jnp.where(padding_mask[:, None, None, :] != 0,
                           -2.0 ** 32 + 1.0, energy)
    aw = jax.nn.softmax(energy, axis=-1)
    O = jnp.einsum('bhqk,bhkd->bhqd', aw, Vp)
    O = O + jnp.einsum('bhqk,bhqkd->bhqd', aw, tVh)
    O = O.transpose(0, 2, 1, 3).reshape(B, Lq, D)
    O = _linear(O, params["fc_o"])
    return O, aw


# -----------------------------------------------------------------------------
# Demo / smoke test
# -----------------------------------------------------------------------------
if __name__ == "__main__":
    B, L, d_model, n_heads = 2, 8, 32, 2   # head_dim = 16

    key = jax.random.PRNGKey(0)
    kp, kq, kk, kv, ktk, ktv = jax.random.split(key, 6)

    params = init_params(kp, d_model)

    Q = jax.random.normal(kq, (B, L, d_model), jnp.float32)
    K = jax.random.normal(kk, (B, L, d_model), jnp.float32)
    V = jax.random.normal(kv, (B, L, d_model), jnp.float32)
    time_matrix_K = jax.random.normal(ktk, (B, L, L, d_model), jnp.float32) * 0.1
    time_matrix_V = jax.random.normal(ktv, (B, L, L, d_model), jnp.float32) * 0.1

    # causal additive attention mask (large negative above the diagonal)
    attn_mask = jnp.where(
        jnp.triu(jnp.ones((L, L), jnp.bool_), k=1), -1e9, 0.0).astype(jnp.float32)
    # padding mask: last 2 key positions of batch element 1 are padding
    padding_mask = jnp.zeros((B, L), jnp.int32).at[1, -2:].set(1)

    O, attn = time_aware_mha(params, Q, K, V, time_matrix_K, time_matrix_V,
                             padding_mask=padding_mask, attn_mask=attn_mask,
                             n_heads=n_heads)
    jax.block_until_ready((O, attn))

    # shape / sanity checks
    assert O.shape == (B, L, d_model)
    assert attn.shape == (B, n_heads, L, L)
    assert bool(jnp.all(jnp.isfinite(O))) and bool(jnp.all(jnp.isfinite(attn)))
    assert bool(jnp.allclose(jnp.sum(attn, axis=-1), 1.0, atol=1e-3))
    # padded keys of batch element 1 get ~0 attention
    assert bool(jnp.all(attn[1, :, :, -2:] < 1e-6))

    # compare against the plain-JAX f32 reference of the PyTorch module
    O_ref, attn_ref = reference_mha(params, Q, K, V, time_matrix_K,
                                    time_matrix_V, padding_mask, attn_mask,
                                    n_heads)
    assert bool(jnp.allclose(O, O_ref, atol=7.5e-2, rtol=7.5e-2))
    assert bool(jnp.allclose(attn, attn_ref, atol=2.5e-2))

    print("KERNEL_OK")
</pallas_src>

<mosaic_0001>
module attributes {stable_mosaic.version = 11 : i64} {
  func.func @_tisas_attn_kernel(%arg0: i32, %arg1: i32, %arg2: memref<8x8xf32, #tpu.memory_space<vmem>>, %arg3: memref<1x1x8xf32, #tpu.memory_space<vmem>>, %arg4: memref<1x8x32xbf16, #tpu.memory_space<vmem>>, %arg5: memref<1x8x32xbf16, #tpu.memory_space<vmem>>, %arg6: memref<1x8x32xbf16, #tpu.memory_space<vmem>>, %arg7: memref<1x8x8x32xbf16, #tpu.memory_space<vmem>>, %arg8: memref<1x8x8x32xbf16, #tpu.memory_space<vmem>>, %arg9: memref<1x8x32xf32, #tpu.memory_space<vmem>>, %arg10: memref<1x2x8x8xf32, #tpu.memory_space<vmem>>) attributes {dimension_semantics = [#tpu.dimension_semantics<parallel>, #tpu.dimension_semantics<parallel>], iteration_bounds = array<i64: 2, 1>, scalar_prefetch = 0 : i64, scratch_operands = 0 : i64, tpu.core_type = #tpu.core_type<tc>, window_params = [{transform_indices = @transform_0, window_bounds = array<i64: 8, 8>}, {transform_indices = @transform_1, window_bounds = array<i64: 1, 1, 8>}, {transform_indices = @transform_2, window_bounds = array<i64: 1, 8, 32>}, {transform_indices = @transform_3, window_bounds = array<i64: 1, 8, 32>}, {transform_indices = @transform_4, window_bounds = array<i64: 1, 8, 32>}, {transform_indices = @transform_5, window_bounds = array<i64: 1, 8, 8, 32>}, {transform_indices = @transform_6, window_bounds = array<i64: 1, 8, 8, 32>}, {transform_indices = @transform_7, window_bounds = array<i64: 1, 8, 32>}, {transform_indices = @transform_8, window_bounds = array<i64: 1, 2, 8, 8>}]} {
    %c0 = arith.constant 0 : index
    %c0_0 = arith.constant 0 : index
    %c0_1 = arith.constant 0 : index
    %0 = vector.load %arg4[%c0, %c0_0, %c0_1] : memref<1x8x32xbf16, #tpu.memory_space<vmem>>, vector<1x8x32xbf16>
    %1 = vector.shape_cast %0 : vector<1x8x32xbf16> to vector<8x32xbf16>
    %2 = arith.extf %1 : vector<8x32xbf16> to vector<8x32xf32>
    %cst = arith.constant 2.500000e-01 : f32
    %3 = vector.broadcast %cst : f32 to vector<8x32xf32>
    %4 = arith.mulf %2, %3 : vector<8x32xf32>
    %5 = arith.truncf %4 : vector<8x32xf32> to vector<8x32xbf16>
    %c0_2 = arith.constant 0 : index
    %c0_3 = arith.constant 0 : index
    %c0_4 = arith.constant 0 : index
    %6 = vector.load %arg5[%c0_2, %c0_3, %c0_4] : memref<1x8x32xbf16, #tpu.memory_space<vmem>>, vector<1x8x32xbf16>
    %7 = vector.shape_cast %6 : vector<1x8x32xbf16> to vector<8x32xbf16>
    %c0_5 = arith.constant 0 : index
    %c0_6 = arith.constant 0 : index
    %c0_7 = arith.constant 0 : index
    %8 = vector.load %arg6[%c0_5, %c0_6, %c0_7] : memref<1x8x32xbf16, #tpu.memory_space<vmem>>, vector<1x8x32xbf16>
    %9 = vector.shape_cast %8 : vector<1x8x32xbf16> to vector<8x32xbf16>
    %c0_8 = arith.constant 0 : index
    %c0_9 = arith.constant 0 : index
    %c0_10 = arith.constant 0 : index
    %c0_11 = arith.constant 0 : index
    %10 = vector.load %arg7[%c0_8, %c0_9, %c0_10, %c0_11] : memref<1x8x8x32xbf16, #tpu.memory_space<vmem>>, vector<1x8x8x32xbf16>
    %11 = vector.shape_cast %10 : vector<1x8x8x32xbf16> to vector<8x8x32xbf16>
    %c0_12 = arith.constant 0 : index
    %c0_13 = arith.constant 0 : index
    %c0_14 = arith.constant 0 : index
    %c0_15 = arith.constant 0 : index
    %12 = vector.load %arg8[%c0_12, %c0_13, %c0_14, %c0_15] : memref<1x8x8x32xbf16, #tpu.memory_space<vmem>>, vector<1x8x8x32xbf16>
    %13 = vector.shape_cast %12 : vector<1x8x8x32xbf16> to vector<8x8x32xbf16>
    %c0_16 = arith.constant 0 : index
    %c0_17 = arith.constant 0 : index
    %14 = vector.load %arg2[%c0_16, %c0_17] : memref<8x8xf32, #tpu.memory_space<vmem>>, vector<8x8xf32>
    %c0_18 = arith.constant 0 : index
    %c0_19 = arith.constant 0 : index
    %c0_20 = arith.constant 0 : index
    %15 = vector.load %arg3[%c0_18, %c0_19, %c0_20] : memref<1x1x8xf32, #tpu.memory_space<vmem>>, vector<1x1x8xf32>
    %16 = vector.shape_cast %15 : vector<1x1x8xf32> to vector<1x8xf32>
    %17 = vector.broadcast %16 : vector<1x8xf32> to vector<8x8xf32>
    %18 = arith.addf %14, %17 : vector<8x8xf32>
    %19 = vector.extract_strided_slice %5 {offsets = [0, 0], sizes = [8, 16], strides = [1, 1]} : vector<8x32xbf16> to vector<8x16xbf16>
    %20 = vector.extract_strided_slice %4 {offsets = [0, 0], sizes = [8, 16], strides = [1, 1]} : vector<8x32xf32> to vector<8x16xf32>
    %21 = vector.extract_strided_slice %7 {offsets = [0, 0], sizes = [8, 16], strides = [1, 1]} : vector<8x32xbf16> to vector<8x16xbf16>
    %22 = vector.extract_strided_slice %9 {offsets = [0, 0], sizes = [8, 16], strides = [1, 1]} : vector<8x32xbf16> to vector<8x16xbf16>
    %23 = vector.extract_strided_slice %11 {offsets = [0, 0, 0], sizes = [8, 8, 16], strides = [1, 1, 1]} : vector<8x8x32xbf16> to vector<8x8x16xbf16>
    %24 = vector.extract_strided_slice %13 {offsets = [0, 0, 0], sizes = [8, 8, 16], strides = [1, 1, 1]} : vector<8x8x32xbf16> to vector<8x8x16xbf16>
    %cst_21 = arith.constant dense<0.000000e+00> : vector<8x8xf32>
    %25 = tpu.matmul %19, %21, %cst_21 {dimension_numbers = #tpu.dot_dimension_numbers<[1], [1], [0], [0], [0, 0, 1, 0], [], []>} : vector<8x16xbf16>, vector<8x16xbf16>, vector<8x8xf32> -> vector<8x8xf32>
    %26 = vector.shape_cast %20 : vector<8x16xf32> to vector<8x1x16xf32>
    %27 = arith.extf %23 : vector<8x8x16xbf16> to vector<8x8x16xf32>
    %28 = vector.broadcast %26 : vector<8x1x16xf32> to vector<8x8x16xf32>
    %29 = arith.mulf %27, %28 : vector<8x8x16xf32>
    %cst_22 = arith.constant dense<0.000000e+00> : vector<8x8xf32>
    %30 = vector.multi_reduction <add>, %29, %cst_22 [2] : vector<8x8x16xf32> to vector<8x8xf32>
    %31 = arith.addf %25, %30 : vector<8x8xf32>
    %32 = arith.addf %31, %18 : vector<8x8xf32>
    %cst_23 = arith.constant dense<0xFF800000> : vector<8xf32>
    %33 = vector.multi_reduction <maximumf>, %32, %cst_23 [1] : vector<8x8xf32> to vector<8xf32>
    %34 = vector.shape_cast %33 : vector<8xf32> to vector<8x1xf32>
    %35 = vector.broadcast %34 : vector<8x1xf32> to vector<8x8xf32>
    %36 = arith.subf %32, %35 : vector<8x8xf32>
    %37 = math.exp %36 : vector<8x8xf32>
    %cst_24 = arith.constant dense<0.000000e+00> : vector<8xf32>
    %38 = vector.multi_reduction <add>, %37, %cst_24 [1] : vector<8x8xf32> to vector<8xf32>
    %39 = vector.shape_cast %38 : vector<8xf32> to vector<8x1xf32>
    %40 = tpu.reciprocal %39 {approx = true} : vector<8x1xf32> -> vector<8x1xf32>
    %41 = arith.mulf %39, %40 : vector<8x1xf32>
    %cst_25 = arith.constant 2.000000e+00 : f32
    %42 = vector.broadcast %cst_25 : f32 to vector<8x1xf32>
    %43 = arith.subf %42, %41 : vector<8x1xf32>
    %44 = arith.mulf %40, %43 : vector<8x1xf32>
    %45 = vector.broadcast %44 : vector<8x1xf32> to vector<8x8xf32>
    %46 = arith.mulf %37, %45 : vector<8x8xf32>
    %c0_26 = arith.constant 0 : index
    %c0_27 = arith.constant 0 : index
    %c0_28 = arith.constant 0 : index
    %c0_29 = arith.constant 0 : index
    %47 = vector.load %arg10[%c0_26, %c0_27, %c0_28, %c0_29] : memref<1x2x8x8xf32, #tpu.memory_space<vmem>>, vector<1x1x8x8xf32>
    %48 = vector.shape_cast %47 : vector<1x1x8x8xf32> to vector<8x8xf32>
    %49 = vector.shape_cast %46 : vector<8x8xf32> to vector<1x1x8x8xf32>
    tpu.vector_store %arg10[%c0_26, %c0_27, %c0_28, %c0_29], %49 {strides = array<i32>} : memref<1x2x8x8xf32, #tpu.memory_space<vmem>>, vector<1x1x8x8xf32>,
    %50 = arith.truncf %46 : vector<8x8xf32> to vector<8x8xbf16>
    %cst_30 = arith.constant dense<0.000000e+00> : vector<8x16xf32>
    %51 = tpu.matmul %50, %22, %cst_30 {dimension_numbers = #tpu.dot_dimension_numbers<[1], [0], [0], [1], [0, 0, 1, 1], [], []>} : vector<8x8xbf16>, vector<8x16xbf16>, vector<8x16xf32> -> vector<8x16xf32>
    %52 = vector.shape_cast %46 : vector<8x8xf32> to vector<8x8x1xf32>
    %53 = arith.extf %24 : vector<8x8x16xbf16> to vector<8x8x16xf32>
    %54 = vector.broadcast %52 : vector<8x8x1xf32> to vector<8x8x16xf32>
    %55 = arith.mulf %54, %53 : vector<8x8x16xf32>
    %cst_31 = arith.constant dense<0.000000e+00> : vector<8x16xf32>
    %56 = vector.multi_reduction <add>, %55, %cst_31 [1] : vector<8x8x16xf32> to vector<8x16xf32>
    %57 = arith.addf %51, %56 : vector<8x16xf32>
    %58 = vector.extract_strided_slice %5 {offsets = [0, 16], sizes = [8, 16], strides = [1, 1]} : vector<8x32xbf16> to vector<8x16xbf16>
    %59 = vector.extract_strided_slice %4 {offsets = [0, 16], sizes = [8, 16], strides = [1, 1]} : vector<8x32xf32> to vector<8x16xf32>
    %60 = vector.extract_strided_slice %7 {offsets = [0, 16], sizes = [8, 16], strides = [1, 1]} : vector<8x32xbf16> to vector<8x16xbf16>
    %61 = vector.extract_strided_slice %9 {offsets = [0, 16], sizes = [8, 16], strides = [1, 1]} : vector<8x32xbf16> to vector<8x16xbf16>
    %62 = vector.extract_strided_slice %11 {offsets = [0, 0, 16], sizes = [8, 8, 16], strides = [1, 1, 1]} : vector<8x8x32xbf16> to vector<8x8x16xbf16>
    %63 = vector.extract_strided_slice %13 {offsets = [0, 0, 16], sizes = [8, 8, 16], strides = [1, 1, 1]} : vector<8x8x32xbf16> to vector<8x8x16xbf16>
    %cst_32 = arith.constant dense<0.000000e+00> : vector<8x8xf32>
    %64 = tpu.matmul %58, %60, %cst_32 {dimension_numbers = #tpu.dot_dimension_numbers<[1], [1], [0], [0], [0, 0, 1, 0], [], []>} : vector<8x16xbf16>, vector<8x16xbf16>, vector<8x8xf32> -> vector<8x8xf32>
    %65 = vector.shape_cast %59 : vector<8x16xf32> to vector<8x1x16xf32>
    %66 = arith.extf %62 : vector<8x8x16xbf16> to vector<8x8x16xf32>
    %67 = vector.broadcast %65 : vector<8x1x16xf32> to vector<8x8x16xf32>
    %68 = arith.mulf %66, %67 : vector<8x8x16xf32>
    %cst_33 = arith.constant dense<0.000000e+00> : vector<8x8xf32>
    %69 = vector.multi_reduction <add>, %68, %cst_33 [2] : vector<8x8x16xf32> to vector<8x8xf32>
    %70 = arith.addf %64, %69 : vector<8x8xf32>
    %71 = arith.addf %70, %18 : vector<8x8xf32>
    %cst_34 = arith.constant dense<0xFF800000> : vector<8xf32>
    %72 = vector.multi_reduction <maximumf>, %71, %cst_34 [1] : vector<8x8xf32> to vector<8xf32>
    %73 = vector.shape_cast %72 : vector<8xf32> to vector<8x1xf32>
    %74 = vector.broadcast %73 : vector<8x1xf32> to vector<8x8xf32>
    %75 = arith.subf %71, %74 : vector<8x8xf32>
    %76 = math.exp %75 : vector<8x8xf32>
    %cst_35 = arith.constant dense<0.000000e+00> : vector<8xf32>
    %77 = vector.multi_reduction <add>, %76, %cst_35 [1] : vector<8x8xf32> to vector<8xf32>
    %78 = vector.shape_cast %77 : vector<8xf32> to vector<8x1xf32>
    %79 = tpu.reciprocal %78 {approx = true} : vector<8x1xf32> -> vector<8x1xf32>
    %80 = arith.mulf %78, %79 : vector<8x1xf32>
    %cst_36 = arith.constant 2.000000e+00 : f32
    %81 = vector.broadcast %cst_36 : f32 to vector<8x1xf32>
    %82 = arith.subf %81, %80 : vector<8x1xf32>
    %83 = arith.mulf %79, %82 : vector<8x1xf32>
    %84 = vector.broadcast %83 : vector<8x1xf32> to vector<8x8xf32>
    %85 = arith.mulf %76, %84 : vector<8x8xf32>
    %c0_37 = arith.constant 0 : index
    %c1 = arith.constant 1 : index
    %c0_38 = arith.constant 0 : index
    %c0_39 = arith.constant 0 : index
    %86 = vector.load %arg10[%c0_37, %c1, %c0_38, %c0_39] : memref<1x2x8x8xf32, #tpu.memory_space<vmem>>, vector<1x1x8x8xf32>
    %87 = vector.shape_cast %86 : vector<1x1x8x8xf32> to vector<8x8xf32>
    %88 = vector.shape_cast %85 : vector<8x8xf32> to vector<1x1x8x8xf32>
    tpu.vector_store %arg10[%c0_37, %c1, %c0_38, %c0_39], %88 {strides = array<i32>} : memref<1x2x8x8xf32, #tpu.memory_space<vmem>>, vector<1x1x8x8xf32>,
    %89 = arith.truncf %85 : vector<8x8xf32> to vector<8x8xbf16>
    %cst_40 = arith.constant dense<0.000000e+00> : vector<8x16xf32>
    %90 = tpu.matmul %89, %61, %cst_40 {dimension_numbers = #tpu.dot_dimension_numbers<[1], [0], [0], [1], [0, 0, 1, 1], [], []>} : vector<8x8xbf16>, vector<8x16xbf16>, vector<8x16xf32> -> vector<8x16xf32>
    %91 = vector.shape_cast %85 : vector<8x8xf32> to vector<8x8x1xf32>
    %92 = arith.extf %63 : vector<8x8x16xbf16> to vector<8x8x16xf32>
    %93 = vector.broadcast %91 : vector<8x8x1xf32> to vector<8x8x16xf32>
    %94 = arith.mulf %93, %92 : vector<8x8x16xf32>
    %cst_41 = arith.constant dense<0.000000e+00> : vector<8x16xf32>
    %95 = vector.multi_reduction <add>, %94, %cst_41 [1] : vector<8x8x16xf32> to vector<8x16xf32>
    %96 = arith.addf %90, %95 : vector<8x16xf32>
    %97 = tpu.concatenate %57, %96 in 1 : vector<8x16xf32>, vector<8x16xf32> -> vector<8x32xf32>
    %c0_42 = arith.constant 0 : index
    %c0_43 = arith.constant 0 : index
    %c0_44 = arith.constant 0 : index
    %98 = vector.load %arg9[%c0_42, %c0_43, %c0_44] : memref<1x8x32xf32, #tpu.memory_space<vmem>>, vector<1x8x32xf32>
    %99 = vector.shape_cast %98 : vector<1x8x32xf32> to vector<8x32xf32>
    %100 = vector.shape_cast %97 : vector<8x32xf32> to vector<1x8x32xf32>
    tpu.vector_store %arg9[%c0_42, %c0_43, %c0_44], %100 {strides = array<i32>} : memref<1x8x32xf32, #tpu.memory_space<vmem>>, vector<1x8x32xf32>,
    return
  }
  func.func @transform_0(%arg0: i32, %arg1: i32) -> (i32, i32) {
    %c0_i32 = arith.constant 0 : i32
    %c0_i32_0 = arith.constant 0 : i32
    return %arg1, %c0_i32 : i32, i32
  }
  func.func @transform_1(%arg0: i32, %arg1: i32) -> (i32, i32, i32) {
    %c0_i32 = arith.constant 0 : i32
    %c0_i32_0 = arith.constant 0 : i32
    %c0_i32_1 = arith.constant 0 : i32
    return %arg0, %c0_i32, %c0_i32_0 : i32, i32, i32
  }
  func.func @transform_2(%arg0: i32, %arg1: i32) -> (i32, i32, i32) {
    %c0_i32 = arith.constant 0 : i32
    %c0_i32_0 = arith.constant 0 : i32
    return %arg0, %arg1, %c0_i32 : i32, i32, i32
  }
  func.func @transform_3(%arg0: i32, %arg1: i32) -> (i32, i32, i32) {
    %c0_i32 = arith.constant 0 : i32
    %c0_i32_0 = arith.constant 0 : i32
    %c0_i32_1 = arith.constant 0 : i32
    return %arg0, %c0_i32, %c0_i32_0 : i32, i32, i32
  }
  func.func @transform_4(%arg0: i32, %arg1: i32) -> (i32, i32, i32) {
    %c0_i32 = arith.constant 0 : i32
    %c0_i32_0 = arith.constant 0 : i32
    %c0_i32_1 = arith.constant 0 : i32
    return %arg0, %c0_i32, %c0_i32_0 : i32, i32, i32
  }
  func.func @transform_5(%arg0: i32, %arg1: i32) -> (i32, i32, i32, i32) {
    %c0_i32 = arith.constant 0 : i32
    %c0_i32_0 = arith.constant 0 : i32
    %c0_i32_1 = arith.constant 0 : i32
    return %arg0, %arg1, %c0_i32, %c0_i32_0 : i32, i32, i32, i32
  }
  func.func @transform_6(%arg0: i32, %arg1: i32) -> (i32, i32, i32, i32) {
    %c0_i32 = arith.constant 0 : i32
    %c0_i32_0 = arith.constant 0 : i32
    %c0_i32_1 = arith.constant 0 : i32
    return %arg0, %arg1, %c0_i32, %c0_i32_0 : i32, i32, i32, i32
  }
  func.func @transform_7(%arg0: i32, %arg1: i32) -> (i32, i32, i32) {
    %c0_i32 = arith.constant 0 : i32
    %c0_i32_0 = arith.constant 0 : i32
    return %arg0, %arg1, %c0_i32 : i32, i32, i32
  }
  func.func @transform_8(%arg0: i32, %arg1: i32) -> (i32, i32, i32, i32) {
    %c0_i32 = arith.constant 0 : i32
    %c0_i32_0 = arith.constant 0 : i32
    %c0_i32_1 = arith.constant 0 : i32
    return %arg0, %c0_i32, %arg1, %c0_i32_0 : i32, i32, i32, i32
  }
}

</mosaic_0001>

<llo_original>
// kernel: tpu_custom_call.1
$region0: #{tpu_custom_call.1}
  #allocation0 [shape = 'u32[]', space=smem, size = 0x4, offset = 0x4, fixed_abs, tag = 'smem constant byte address 0x4 - core index']
  #allocation1 [shape = 'u32[144,128]{1,0:T(1,128)}', space=vmem, size = 0x12000, scoped, tag = 'internal scratch']
  %s0 = inlined_call_operand.hbm [shape: f32[8,8], index: 0, kind: input, shape index: {}]
  %s1 = inlined_call_operand.vmem [shape: f32[2,1,8], index: 1, kind: input, shape index: {}]
  %s2 = inlined_call_operand.hbm [shape: bf16[2,8,32], index: 2, kind: input, shape index: {}]
  %s3 = inlined_call_operand.vmem [shape: bf16[2,8,32], index: 3, kind: input, shape index: {}]
  %s4 = inlined_call_operand.hbm [shape: bf16[2,8,32], index: 4, kind: input, shape index: {}]
  %s5 = inlined_call_operand.hbm [shape: bf16[2,8,8,32], index: 5, kind: input, shape index: {}]
  %s6 = inlined_call_operand.hbm [shape: bf16[2,8,8,32], index: 6, kind: input, shape index: {}]
  %s7 = inlined_call_operand.hbm [shape: f32[2,8,32], index: 7, kind: output, shape index: {0}]
  %s8 = inlined_call_operand.hbm [shape: f32[2,2,8,8], index: 8, kind: output, shape index: {1}]
  %9 = xla_tuple %s7, %s8
  %s10 = sld [smem:[#allocation0]]
  $region89: #{tpu_custom_call.1} parent=0
    _
  %s12 = ssub.s32 1, %s10
  %s13 = scalar_select 0, %s12, %s10
  $region1: #{tpu_custom_call.1} parent=0
    #allocation2 [shape = 'u8[4096]{0}', space=vmem, size = 0x1000, scoped, tag = 'input window, operand 0, single buffered']
    #allocation3 [shape = 's32[2]{0}', space=sflag, size = 0x8, scoped, tag = 'scoped memory for tpu_custom_call.1']
    #allocation4 [shape = 's32[2]{0}', space=sflag, size = 0x8, scoped, tag = 'scoped memory for tpu_custom_call.1']
    #allocation5 [shape = 'u8[4096]{0}', space=vmem, size = 0x1000, scoped, tag = 'input window, operand 2']
    #allocation6 [shape = 's32[2]{0}', space=sflag, size = 0x8, scoped, tag = 'scoped memory for tpu_custom_call.1']
    #allocation7 [shape = 'u8[4096]{0}', space=vmem, size = 0x1000, scoped, tag = 'input window, operand 4']
    #allocation8 [shape = 'u8[32768]{0}', space=vmem, size = 0x8000, scoped, tag = 'input window, operand 5']
    #allocation9 [shape = 's32[2]{0}', space=sflag, size = 0x8, scoped, tag = 'scoped memory for tpu_custom_call.1']
    #allocation10 [shape = 'u8[32768]{0}', space=vmem, size = 0x8000, scoped, tag = 'input window, operand 6']
    #allocation11 [shape = 'u8[8192]{0}', space=vmem, size = 0x2000, scoped, tag = 'output window, operand 0']
    #allocation12 [shape = 'u8[16384]{0}', space=vmem, size = 0x4000, scoped, tag = 'output window, operand 1']
    #allocation13 [shape = 's32[2]{0}', space=sflag, size = 0x8, scoped, tag = 'scoped memory for tpu_custom_call.1']
    %14 = vsyncpa [#allocation3], 0
    %15 = vsyncpa [#allocation6], 0
    %s16 = scalar_lea.sflag [#allocation6], 1
    %17 = vsyncpa %s16, 0
    %18 = vsyncpa [#allocation9], 0
    %s19 = scalar_lea.sflag [#allocation9], 1
    %20 = vsyncpa %s19, 0
    %21 = vsyncpa [#allocation4], 0
    %s22 = scalar_lea.sflag [#allocation4], 1
    %23 = vsyncpa %s22, 0
    %24 = vsyncpa [#allocation13], 0
    %s25 = scalar_lea.sflag [#allocation13], 1
    %26 = vsyncpa %s25, 0
    loop: start=0, step=1, limit=4
    $region2: #{tpu_custom_call.1} parent=1 // loop_pre_header
      _
    $region3: #{tpu_custom_call.1} parent=1 // loop_header
      %s28 = sphi 0, %s32
      %p29 = scmp.ge.s32.totalorder %s28, 4
      %s35 = sphi 0, %s47
      %s36 = sphi 0, %s43
      %s37 = sphi 0, %s35
      %s38 = sphi 0, %s36
      %s39 = sphi 0, %s37
      %s40 = sphi 0, %s38
      %s50 = sphi 0, %s52
      %s53 = sphi 0, %s50
      %s54 = sphi 0, %s53
      %s70 = sphi 0, %s54
      %s76 = sphi 0, %s78
      %s79 = sphi 0, %s76
      %s80 = sphi 0, %s79
      %s96 = sphi 0, %s80
      %s104 = sphi 0, %s106
      %s107 = sphi 0, %s104
      %s108 = sphi 0, %s107
      %s124 = sphi 0, %s108
      %s130 = sphi 0, %s132
      %s133 = sphi 0, %s130
      %s134 = sphi 0, %s133
      %s150 = sphi 0, %s134
      %s156 = sphi 0, %s158
      %s159 = sphi 0, %s156
      %s160 = sphi 0, %s159
      %s176 = sphi 0, %s160
      %s184 = sphi 0, %s186
      %s187 = sphi 0, %s184
      %s188 = sphi 0, %s187
      %s204 = sphi 0, %s188
      %s212 = sphi 0, %s214
      %s215 = sphi 0, %s212
      %s216 = sphi 0, %s215
      %s232 = sphi 0, %s216
      %s240 = sphi 0, %s242
      %s243 = sphi 0, %s240
      %s244 = sphi 0, %s243
      %s260 = sphi 0, %s244
      %s268 = sphi 0, %s270
      %s271 = sphi 0, %s268
      %s272 = sphi 0, %s271
      %s288 = sphi 0, %s272
    $region4: #{tpu_custom_call.1} parent=1 // loop_header_branch
      %31 = sbr.rel (%p29) target = $region8
    $region5: #{tpu_custom_call.1} parent=1 // loop_body
      %s33 = ssub.s32 %s28, 1
      %s34 = ssub.s32 %s28, 2
      %s41 = sadd.s32 1, %s36
      %p42 = scmp.ge.s32.totalorder %s41, 1
      %s43 = scalar_select %p42, 0, %s41
      %s44 = sadd.s32 1, %s35
      %s45 = scalar_select %p42, %s44, %s35
      %p46 = scmp.ge.s32.totalorder %s45, 2
      %s47 = scalar_select %p46, 0, %s45
      %s48 = ssub.s32 %s36, %s43
      %p49 = scmp.eq.s32.totalorder %s48, 0
      %s51 = sadd.s32 %s50, 1
      %s52 = scalar_select %p49, %s50, %s51
      %p55 = pneg %p49
      %p56 = scmp.eq.s32.totalorder %s28, 1
      %p57 = por %p55, %p56
      %p58 = scmp.ne.s32.totalorder %s50, %s53
      %p59 = scmp.eq.s32.totalorder %s28, 0
      %p60 = por %p58, %p59
      %p61 = scmp.ne.s32.totalorder %s50, %s53
      %p62 = scmp.eq.s32.totalorder %s33, 1
      %p63 = por %p61, %p62
      %p64 = scmp.ne.s32.totalorder %s53, %s54
      %p65 = scmp.eq.s32.totalorder %s33, 0
      %p66 = por %p64, %p65
      %p67 = scmp.ne.s32.totalorder %s53, %s54
      %p68 = scmp.eq.s32.totalorder %s34, 1
      %p69 = por %p67, %p68
      %p71 = scmp.ne.s32.totalorder %s54, %s70
      %p72 = scmp.eq.s32.totalorder %s34, 0
      %p73 = por %p71, %p72
      %s74 = ssub.s32 %s35, %s47
      %p75 = scmp.eq.s32.totalorder %s74, 0
      %s77 = sadd.s32 %s76, 1
      %s78 = scalar_select %p75, %s76, %s77
      %p81 = pneg %p75
      %p82 = scmp.eq.s32.totalorder %s28, 1
      %p83 = por %p81, %p82
      %p84 = scmp.ne.s32.totalorder %s76, %s79
      %p85 = scmp.eq.s32.totalorder %s28, 0
      %p86 = por %p84, %p85
      %p87 = scmp.ne.s32.totalorder %s76, %s79
      %p88 = scmp.eq.s32.totalorder %s33, 1
      %p89 = por %p87, %p88
      %p90 = scmp.ne.s32.totalorder %s79, %s80
      %p91 = scmp.eq.s32.totalorder %s33, 0
      %p92 = por %p90, %p91
      %p93 = scmp.ne.s32.totalorder %s79, %s80
      %p94 = scmp.eq.s32.totalorder %s34, 1
      %p95 = por %p93, %p94
      %p97 = scmp.ne.s32.totalorder %s80, %s96
      %p98 = scmp.eq.s32.totalorder %s34, 0
      %p99 = por %p97, %p98
      %s100 = ssub.s32 %s35, %s47
      %s101 = ssub.s32 %s36, %s43
      %s102 = sor.u32 %s100, %s101
      %p103 = scmp.eq.s32.totalorder %s102, 0
      %s105 = sadd.s32 %s104, 1
      %s106 = scalar_select %p103, %s104, %s105
      %p109 = pneg %p103
      %p110 = scmp.eq.s32.totalorder %s28, 1
      %p111 = por %p109, %p110
      %p112 = scmp.ne.s32.totalorder %s104, %s107
      %p113 = scmp.eq.s32.totalorder %s28, 0
      %p114 = por %p112, %p113
      %p115 = scmp.ne.s32.totalorder %s104, %s107
      %p116 = scmp.eq.s32.totalorder %s33, 1
      %p117 = por %p115, %p116
      %p118 = scmp.ne.s32.totalorder %s107, %s108
      %p119 = scmp.eq.s32.totalorder %s33, 0
      %p120 = por %p118, %p119
      %p121 = scmp.ne.s32.totalorder %s107, %s108
      %p122 = scmp.eq.s32.totalorder %s34, 1
      %p123 = por %p121, %p122
      %p125 = scmp.ne.s32.totalorder %s108, %s124
      %p126 = scmp.eq.s32.totalorder %s34, 0
      %p127 = por %p125, %p126
      %s128 = ssub.s32 %s35, %s47
      %p129 = scmp.eq.s32.totalorder %s128, 0
      %s131 = sadd.s32 %s130, 1
      %s132 = scalar_select %p129, %s130, %s131
      %p135 = pneg %p129
      %p136 = scmp.eq.s32.totalorder %s28, 1
      %p137 = por %p135, %p136
      %p138 = scmp.ne.s32.totalorder %s130, %s133
      %p139 = scmp.eq.s32.totalorder %s28, 0
      %p140 = por %p138, %p139
      %p141 = scmp.ne.s32.totalorder %s130, %s133
      %p142 = scmp.eq.s32.totalorder %s33, 1
      %p143 = por %p141, %p142
      %p144 = scmp.ne.s32.totalorder %s133, %s134
      %p145 = scmp.eq.s32.totalorder %s33, 0
      %p146 = por %p144, %p145
      %p147 = scmp.ne.s32.totalorder %s133, %s134
      %p148 = scmp.eq.s32.totalorder %s34, 1
      %p149 = por %p147, %p148
      %p151 = scmp.ne.s32.totalorder %s134, %s150
      %p152 = scmp.eq.s32.totalorder %s34, 0
      %p153 = por %p151, %p152
      %s154 = ssub.s32 %s35, %s47
      %p155 = scmp.eq.s32.totalorder %s154, 0
      %s157 = sadd.s32 %s156, 1
      %s158 = scalar_select %p155, %s156, %s157
      %p161 = pneg %p155
      %p162 = scmp.eq.s32.totalorder %s28, 1
      %p163 = por %p161, %p162
      %p164 = scmp.ne.s32.totalorder %s156, %s159
      %p165 = scmp.eq.s32.totalorder %s28, 0
      %p166 = por %p164, %p165
      %p167 = scmp.ne.s32.totalorder %s156, %s159
      %p168 = scmp.eq.s32.totalorder %s33, 1
      %p169 = por %p167, %p168
      %p170 = scmp.ne.s32.totalorder %s159, %s160
      %p171 = scmp.eq.s32.totalorder %s33, 0
      %p172 = por %p170, %p171
      %p173 = scmp.ne.s32.totalorder %s159, %s160
      %p174 = scmp.eq.s32.totalorder %s34, 1
      %p175 = por %p173, %p174
      %p177 = scmp.ne.s32.totalorder %s160, %s176
      %p178 = scmp.eq.s32.totalorder %s34, 0
      %p179 = por %p177, %p178
      %s180 = ssub.s32 %s35, %s47
      %s181 = ssub.s32 %s36, %s43
      %s182 = sor.u32 %s180, %s181
      %p183 = scmp.eq.s32.totalorder %s182, 0
      %s185 = sadd.s32 %s184, 1
      %s186 = scalar_select %p183, %s184, %s185
      %p189 = pneg %p183
      %p190 = scmp.eq.s32.totalorder %s28, 1
      %p191 = por %p189, %p190
      %p192 = scmp.ne.s32.totalorder %s184, %s187
      %p193 = scmp.eq.s32.totalorder %s28, 0
      %p194 = por %p192, %p193
      %p195 = scmp.ne.s32.totalorder %s184, %s187
      %p196 = scmp.eq.s32.totalorder %s33, 1
      %p197 = por %p195, %p196
      %p198 = scmp.ne.s32.totalorder %s187, %s188
      %p199 = scmp.eq.s32.totalorder %s33, 0
      %p200 = por %p198, %p199
      %p201 = scmp.ne.s32.totalorder %s187, %s188
      %p202 = scmp.eq.s32.totalorder %s34, 1
      %p203 = por %p201, %p202
      %p205 = scmp.ne.s32.totalorder %s188, %s204
      %p206 = scmp.eq.s32.totalorder %s34, 0
      %p207 = por %p205, %p206
      %s208 = ssub.s32 %s35, %s47
      %s209 = ssub.s32 %s36, %s43
      %s210 = sor.u32 %s208, %s209
      %p211 = scmp.eq.s32.totalorder %s210, 0
      %s213 = sadd.s32 %s212, 1
      %s214 = scalar_select %p211, %s212, %s213
      %p217 = pneg %p211
      %p218 = scmp.eq.s32.totalorder %s28, 1
      %p219 = por %p217, %p218
      %p220 = scmp.ne.s32.totalorder %s212, %s215
      %p221 = scmp.eq.s32.totalorder %s28, 0
      %p222 = por %p220, %p221
      %p223 = scmp.ne.s32.totalorder %s212, %s215
      %p224 = scmp.eq.s32.totalorder %s33, 1
      %p225 = por %p223, %p224
      %p226 = scmp.ne.s32.totalorder %s215, %s216
      %p227 = scmp.eq.s32.totalorder %s33, 0
      %p228 = por %p226, %p227
      %p229 = scmp.ne.s32.totalorder %s215, %s216
      %p230 = scmp.eq.s32.totalorder %s34, 1
      %p231 = por %p229, %p230
      %p233 = scmp.ne.s32.totalorder %s216, %s232
      %p234 = scmp.eq.s32.totalorder %s34, 0
      %p235 = por %p233, %p234
      %s236 = ssub.s32 %s35, %s47
      %s237 = ssub.s32 %s36, %s43
      %s238 = sor.u32 %s236, %s237
      %p239 = scmp.eq.s32.totalorder %s238, 0
      %s241 = sadd.s32 %s240, 1
      %s242 = scalar_select %p239, %s240, %s241
      %p245 = pneg %p239
      %p246 = scmp.eq.s32.totalorder %s28, 1
      %p247 = por %p245, %p246
      %p248 = scmp.ne.s32.totalorder %s240, %s243
      %p249 = scmp.eq.s32.totalorder %s28, 0
      %p250 = por %p248, %p249
      %p251 = scmp.ne.s32.totalorder %s240, %s243
      %p252 = scmp.eq.s32.totalorder %s33, 1
      %p253 = por %p251, %p252
      %p254 = scmp.ne.s32.totalorder %s243, %s244
      %p255 = scmp.eq.s32.totalorder %s33, 0
      %p256 = por %p254, %p255
      %p257 = scmp.ne.s32.totalorder %s243, %s244
      %p258 = scmp.eq.s32.totalorder %s34, 1
      %p259 = por %p257, %p258
      %p261 = scmp.ne.s32.totalorder %s244, %s260
      %p262 = scmp.eq.s32.totalorder %s34, 0
      %p263 = por %p261, %p262
      %s264 = ssub.s32 %s35, %s47
      %s265 = ssub.s32 %s36, %s43
      %s266 = sor.u32 %s264, %s265
      %p267 = scmp.eq.s32.totalorder %s266, 0
      %s269 = sadd.s32 %s268, 1
      %s270 = scalar_select %p267, %s268, %s269
      %p273 = pneg %p267
      %p274 = scmp.eq.s32.totalorder %s28, 1
      %p275 = por %p273, %p274
      %p276 = scmp.ne.s32.totalorder %s268, %s271
      %p277 = scmp.eq.s32.totalorder %s28, 0
      %p278 = por %p276, %p277
      %p279 = scmp.ne.s32.totalorder %s268, %s271
      %p280 = scmp.eq.s32.totalorder %s33, 1
      %p281 = por %p279, %p280
      %p282 = scmp.ne.s32.totalorder %s271, %s272
      %p283 = scmp.eq.s32.totalorder %s33, 0
      %p284 = por %p282, %p283
      %p285 = scmp.ne.s32.totalorder %s271, %s272
      %p286 = scmp.eq.s32.totalorder %s34, 1
      %p287 = por %p285, %p286
      %p289 = scmp.ne.s32.totalorder %s272, %s288
      %p290 = scmp.eq.s32.totalorder %s34, 0
      %p291 = por %p289, %p290
      %p292 = scmp.le.s32.totalorder 1, %s28
      %p293 = scmp.lt.s32.totalorder %s28, 3
      %p294 = pnand %p292, %p293
      %p295 = pneg %p294
      // Predicated region
      $region9: #{tpu_custom_call.1} parent=5 // pred_check
        _
      $region10: #{tpu_custom_call.1} parent=5 // pred_check_branch
        %297 = sbr.rel (%p294) target = $region12
      $region11: #{tpu_custom_call.1} parent=5 // pred_region
        %s298 = ssub.s32 %s28, 1
        // Predicated region
        $region13: #{tpu_custom_call.1} parent=11 // pred_check
          %p299 = pneg %p66
        $region14: #{tpu_custom_call.1} parent=11 // pred_check_branch
          %301 = sbr.rel (%p299) target = $region16
        $region15: #{tpu_custom_call.1} parent=11 // pred_region
          %s303 = ssub.s32 128, 128
          %304 = vsyncadd [#allocation3], %s303
          %s305 = smul.addr %s38, 128
          %s306 = scalar_lea.hbm %s0, %s305
          %s308 = sshll.u32 [#allocation2], 4
          %s309 = int_to_ptr.vmem [resolvable:$true] %s308
          %311 = dma.hbm_to_vmem [thread:$0]  %s306, 128, %s309, [#allocation3]
        $region16: #{tpu_custom_call.1} parent=11 // pred_fallthru
          _
      $region12: #{tpu_custom_call.1} parent=5 // pred_fallthru
        _
      %p312 = scmp.lt.s32.totalorder %s28, 2
      // Predicated region
      $region17: #{tpu_custom_call.1} parent=5 // pred_check
        %p313 = pneg %p312
      $region18: #{tpu_custom_call.1} parent=5 // pred_check_branch
        %315 = sbr.rel (%p313) target = $region20
      $region19: #{tpu_custom_call.1} parent=5 // pred_region
        // Predicated region
        $region21: #{tpu_custom_call.1} parent=19 // pred_check
          %p316 = pneg %p86
        $region22: #{tpu_custom_call.1} parent=19 // pred_check_branch
          %318 = sbr.rel (%p316) target = $region24
        $region23: #{tpu_custom_call.1} parent=19 // pred_region
          %p319 = scmp.lt.s32.totalorder %s35, 1
          %s320 = scalar_select %p319, %s35, 1
          %s321 = scalar_lea.vmem %s1, %s320
        $region24: #{tpu_custom_call.1} parent=19 // pred_fallthru
          _
        // Predicated region
        $region25: #{tpu_custom_call.1} parent=19 // pred_check
          %p322 = pneg %p114
        $region26: #{tpu_custom_call.1} parent=19 // pred_check_branch
          %324 = sbr.rel (%p322) target = $region28
        $region27: #{tpu_custom_call.1} parent=19 // pred_region
          %s325 = sand.u32 %s28, 1
          %s326 = scalar_lea.sflag [#allocation6], %s325
          %s327 = sand.u32 %s104, 1
          %s328 = smul.addr %s327, 4
          %s329 = scalar_lea.vmem [#allocation5], %s328
          %s331 = ssub.s32 64, 64
          %332 = vsyncadd %s326, %s331
          %s333 = sadd.s32 %s36, %s35
          %s334 = smul.addr %s333, 64
          %s335 = scalar_lea.hbm %s2, %s334
          %s337 = sshll.u32 %s329, 4
          %s338 = int_to_ptr.vmem [resolvable:$true] %s337
          %340 = dma.hbm_to_vmem [thread:$0]  %s335, 64, %s338, %s326
        $region28: #{tpu_custom_call.1} parent=19 // pred_fallthru
          _
        // Predicated region
        $region29: #{tpu_custom_call.1} parent=19 // pred_check
          %p341 = pneg %p140
        $region30: #{tpu_custom_call.1} parent=19 // pred_check_branch
          %343 = sbr.rel (%p341) target = $region32
        $region31: #{tpu_custom_call.1} parent=19 // pred_region
          %p344 = scmp.lt.s32.totalorder %s35, 1
          %s345 = scalar_select %p344, %s35, 1
          %s346 = smul.addr %s345, 4
          %s347 = scalar_lea.vmem %s3, %s346
        $region32: #{tpu_custom_call.1} parent=19 // pred_fallthru
          _
        // Predicated region
        $region33: #{tpu_custom_call.1} parent=19 // pred_check
          %p348 = pneg %p166
        $region34: #{tpu_custom_call.1} parent=19 // pred_check_branch
          %350 = sbr.rel (%p348) target = $region36
        $region35: #{tpu_custom_call.1} parent=19 // pred_region
          %s351 = sand.u32 %s28, 1
          %s352 = scalar_lea.sflag [#allocation6], %s351
          %s353 = sand.u32 %s156, 1
          %s354 = smul.addr %s353, 4
          %s355 = scalar_lea.vmem [#allocation7], %s354
          %s357 = ssub.s32 64, 64
          %358 = vsyncadd %s352, %s357
          %s359 = smul.addr %s35, 64
          %s360 = scalar_lea.hbm %s4, %s359
          %s362 = sshll.u32 %s355, 4
          %s363 = int_to_ptr.vmem [resolvable:$true] %s362
          %365 = dma.hbm_to_vmem [thread:$0]  %s360, 64, %s363, %s352
        $region36: #{tpu_custom_call.1} parent=19 // pred_fallthru
          _
        // Predicated region
        $region37: #{tpu_custom_call.1} parent=19 // pred_check
          %p366 = pneg %p194
        $region38: #{tpu_custom_call.1} parent=19 // pred_check_branch
          %368 = sbr.rel (%p366) target = $region40
        $region39: #{tpu_custom_call.1} parent=19 // pred_region
          %s369 = sand.u32 %s28, 1
          %s370 = scalar_lea.sflag [#allocation9], %s369
          %s371 = sand.u32 %s184, 1
          %s372 = smul.addr %s371, 32
          %s373 = scalar_lea.vmem [#allocation8], %s372
          %s374 = smul.u32 8, %s36
          %s376 = ssub.s32 512, 512
          %377 = vsyncadd %s370, %s376
          %s378 = smul.addr %s35, 8
          %s379 = sadd.s32 %s374, %s378
          %s380 = smul.addr %s379, 64
          %s381 = scalar_lea.hbm %s5, %s380
          %s382 = sshll.u32 %s373, 4
          %s383 = int_to_ptr.vmem [resolvable:$true] %s382
          %388 = dma.hbm_to_vmem [thread:$0]  %s381, 512, %s383, %s370, 64, 64, 4
        $region40: #{tpu_custom_call.1} parent=19 // pred_fallthru
          _
        // Predicated region
        $region41: #{tpu_custom_call.1} parent=19 // pred_check
          %p389 = pneg %p222
        $region42: #{tpu_custom_call.1} parent=19 // pred_check_branch
          %391 = sbr.rel (%p389) target = $region44
        $region43: #{tpu_custom_call.1} parent=19 // pred_region
          %s392 = sand.u32 %s28, 1
          %s393 = scalar_lea.sflag [#allocation9], %s392
          %s394 = sand.u32 %s212, 1
          %s395 = smul.addr %s394, 32
          %s396 = scalar_lea.vmem [#allocation10], %s395
          %s397 = smul.u32 8, %s36
          %s399 = ssub.s32 512, 512
          %400 = vsyncadd %s393, %s399
          %s401 = smul.addr %s35, 8
          %s402 = sadd.s32 %s397, %s401
          %s403 = smul.addr %s402, 64
          %s404 = scalar_lea.hbm %s6, %s403
          %s405 = sshll.u32 %s396, 4
          %s406 = int_to_ptr.vmem [resolvable:$true] %s405
          %411 = dma.hbm_to_vmem [thread:$0]  %s404, 512, %s406, %s393, 64, 64, 4
        $region44: #{tpu_custom_call.1} parent=19 // pred_fallthru
          _
      $region20: #{tpu_custom_call.1} parent=5 // pred_fallthru
        _
      %p412 = scmp.le.s32.totalorder 1, %s28
      %p413 = scmp.lt.s32.totalorder %s28, 3
      %p414 = pnand %p412, %p413
      %p415 = pneg %p414
      // Predicated region
      $region45: #{tpu_custom_call.1} parent=5 // pred_check
        _
      $region46: #{tpu_custom_call.1} parent=5 // pred_check_branch
        %417 = sbr.rel (%p414) target = $region48
      $region47: #{tpu_custom_call.1} parent=5 // pred_region
        %s418 = ssub.s32 %s28, 1
        // Predicated region
        $region49: #{tpu_custom_call.1} parent=47 // pred_check
          %p419 = pneg %p66
        $region50: #{tpu_custom_call.1} parent=47 // pred_check_branch
          %421 = sbr.rel (%p419) target = $region52
        $region51: #{tpu_custom_call.1} parent=47 // pred_region
          %422 = dma.done [#allocation3], 128
        $region52: #{tpu_custom_call.1} parent=47 // pred_fallthru
          _
        %s423 = sand.u32 %s33, 1
        %s424 = scalar_lea.sflag [#allocation6], %s423
        %s425 = sand.u32 %s107, 1
        %s426 = smul.addr %s425, 4
        %s427 = scalar_lea.vmem [#allocation5], %s426
        // Predicated region
        $region53: #{tpu_custom_call.1} parent=47 // pred_check
          %p428 = pneg %p120
        $region54: #{tpu_custom_call.1} parent=47 // pred_check_branch
          %430 = sbr.rel (%p428) target = $region56
        $region55: #{tpu_custom_call.1} parent=47 // pred_region
          %431 = dma.done %s424, 64
        $region56: #{tpu_custom_call.1} parent=47 // pred_fallthru
          _
        %s432 = sand.u32 %s33, 1
        %s433 = scalar_lea.sflag [#allocation6], %s432
        %s434 = sand.u32 %s159, 1
        %s435 = smul.addr %s434, 4
        %s436 = scalar_lea.vmem [#allocation7], %s435
        // Predicated region
        $region57: #{tpu_custom_call.1} parent=47 // pred_check
          %p437 = pneg %p172
        $region58: #{tpu_custom_call.1} parent=47 // pred_check_branch
          %439 = sbr.rel (%p437) target = $region60
        $region59: #{tpu_custom_call.1} parent=47 // pred_region
          %440 = dma.done %s433, 64
        $region60: #{tpu_custom_call.1} parent=47 // pred_fallthru
          _
        %s441 = sand.u32 %s33, 1
        %s442 = scalar_lea.sflag [#allocation9], %s441
        %s443 = sand.u32 %s187, 1
        %s444 = smul.addr %s443, 32
        %s445 = scalar_lea.vmem [#allocation8], %s444
        // Predicated region
        $region61: #{tpu_custom_call.1} parent=47 // pred_check
          %p446 = pneg %p200
        $region62: #{tpu_custom_call.1} parent=47 // pred_check_branch
          %448 = sbr.rel (%p446) target = $region64
        $region63: #{tpu_custom_call.1} parent=47 // pred_region
          %449 = dma.done %s442, 512
        $region64: #{tpu_custom_call.1} parent=47 // pred_fallthru
          _
        %s450 = sand.u32 %s33, 1
        %s451 = scalar_lea.sflag [#allocation9], %s450
        %s452 = sand.u32 %s215, 1
        %s453 = smul.addr %s452, 32
        %s454 = scalar_lea.vmem [#allocation10], %s453
        // Predicated region
        $region65: #{tpu_custom_call.1} parent=47 // pred_check
          %p455 = pneg %p228
        $region66: #{tpu_custom_call.1} parent=47 // pred_check_branch
          %457 = sbr.rel (%p455) target = $region68
        $region67: #{tpu_custom_call.1} parent=47 // pred_region
          %458 = dma.done %s451, 512
        $region68: #{tpu_custom_call.1} parent=47 // pred_fallthru
          _
        %p459 = pneg %p66
        %p460 = pneg %p63
        %p461 = scmp.lt.s32.totalorder %s37, 1
        %s462 = scalar_select %p461, %s37, 1
        %s463 = scalar_lea.vmem %s1, %s462
        %p464 = pneg %p92
        %p465 = pneg %p89
        %s466 = sand.u32 %s33, 1
        %s467 = scalar_lea.sflag [#allocation6], %s466
        %s468 = sand.u32 %s107, 1
        %s469 = smul.addr %s468, 4
        %s470 = scalar_lea.vmem [#allocation5], %s469
        %p471 = pneg %p120
        %p472 = pneg %p117
        %p473 = scmp.lt.s32.totalorder %s37, 1
        %s474 = scalar_select %p473, %s37, 1
        %s475 = smul.addr %s474, 4
        %s476 = scalar_lea.vmem %s3, %s475
        %p477 = pneg %p146
        %p478 = pneg %p143
        %s479 = sand.u32 %s33, 1
        %s480 = scalar_lea.sflag [#allocation6], %s479
        %s481 = sand.u32 %s159, 1
        %s482 = smul.addr %s481, 4
        %s483 = scalar_lea.vmem [#allocation7], %s482
        %p484 = pneg %p172
        %p485 = pneg %p169
        %s486 = sand.u32 %s33, 1
        %s487 = scalar_lea.sflag [#allocation9], %s486
        %s488 = sand.u32 %s187, 1
        %s489 = smul.addr %s488, 32
        %s490 = scalar_lea.vmem [#allocation8], %s489
        %p491 = pneg %p200
        %p492 = pneg %p197
        %s493 = sand.u32 %s33, 1
        %s494 = scalar_lea.sflag [#allocation9], %s493
        %s495 = sand.u32 %s215, 1
        %s496 = smul.addr %s495, 32
        %s497 = scalar_lea.vmem [#allocation10], %s496
        %p498 = pneg %p228
        %p499 = pneg %p225
        %p500 = pneg %p256
        %p501 = pneg %p253
        %s502 = sand.u32 %s243, 1
        %s503 = scalar_lea.sflag [#allocation4], %s502
        %s504 = sand.u32 %s243, 1
        %s505 = smul.addr %s504, 8
        %s506 = scalar_lea.vmem [#allocation11], %s505
        %p507 = pneg %p284
        %p508 = pneg %p281
        %s509 = sand.u32 %s271, 1
        %s510 = scalar_lea.sflag [#allocation13], %s509
        %s511 = sand.u32 %s271, 1
        %s512 = smul.addr %s511, 16
        %s513 = scalar_lea.vmem [#allocation12], %s512
        %p514 = scmp.lt.s32.totalorder %s37, 1
        %s515 = scalar_select %p514, %s37, 1
        %s516 = scalar_lea.vmem %s1, %s515
        %p517 = scmp.lt.s32.totalorder %s37, 1
        %s518 = scalar_select %p517, %s37, 1
        %s519 = smul.addr %s518, 4
        %s520 = scalar_lea.vmem %s3, %s519
        %s521 = smul.u32 8, %s38
        %s522 = smul.u32 8, %s38
        %v524 = vld [vmem:[%s427] sm:$0xf]
        %v525 = vunpack.c.l.bf16 %v524
        %v526 = vmul.f32 %v525, 0.25
        %v527 = vpack.c.bf16 %v526, %v526
        %v528 = vld [vmem:[%s520] sm:$0xf]
        %v529 = vld [vmem:[%s436] sm:$0xf]
        %v530 = vld [vmem:[%s445] sm:$0xf]
        %v531 = vld [vmem:[%s445 + $0x4] sm:$0xf]
        %v532 = vld [vmem:[%s445 + $0x8] sm:$0xf]
        %v533 = vld [vmem:[%s445 + $0xc] sm:$0xf]
        %v534 = vld [vmem:[%s445 + $0x10] sm:$0xf]
        %v535 = vld [vmem:[%s445 + $0x14] sm:$0xf]
        %v536 = vld [vmem:[%s445 + $0x18] sm:$0xf]
        %v537 = vld [vmem:[%s445 + $0x1c] sm:$0xf]
        %v538 = vld [vmem:[%s454] sm:$0xf]
        %v539 = vld [vmem:[%s454 + $0x4] sm:$0xf]
        %v540 = vld [vmem:[%s454 + $0x8] sm:$0xf]
        %v541 = vld [vmem:[%s454 + $0xc] sm:$0xf]
        %v542 = vld [vmem:[%s454 + $0x10] sm:$0xf]
        %v543 = vld [vmem:[%s454 + $0x14] sm:$0xf]
        %v544 = vld [vmem:[%s454 + $0x18] sm:$0xf]
        %v545 = vld [vmem:[%s454 + $0x1c] sm:$0xf]
        %v546 = vld [vmem:[#allocation2] sm:$0xff]
        %v547 = vld [vmem:[%s516] sm:$0x1]
        %v549 = vlaneseq
        %v550 = vshrl.u32 %v549, 7
        %v551 = vsub.s32 0, %v550
        %v552 = vrot.slane %v547, %v551
        %v554 = vadd.f32 %v546, %v552
        %v556 = vcombine.high %v526, %v526
        %v558 = vunpack.c.l.s4 1966171168
        %v559 = vunpack.c.0.s8 %v558
        %v560 = vlaneseq
        %v561 = vshrl.u32 %v560, 7
        %v562 = vsub.s32 %v559, %v561
        %v563 = vrot.slane %v526, %v562
        %v565 = vunpack.c.l.s4 1966171168
        %v566 = vunpack.c.0.s8 %v565
        %v567 = vlaneseq
        %v568 = vshrl.u32 %v567, 7
        %v569 = vsub.s32 %v566, %v568
        %v570 = vrot.slane %v556, %v569
        %v571 = vcombine.high %v563, %v563
        %v572 = vcombine.high %v570, %v570
        %v574 = vunpack.c.l.s4 1966171168
        %v575 = vunpack.c.0.s8 %v574
        %v576 = vlaneseq
        %v577 = vshrl.u32 %v576, 7
        %v578 = vsub.s32 %v575, %v577
        %v579 = vrot.slane %v563, %v578
        %v581 = vunpack.c.l.s4 1966171168
        %v582 = vunpack.c.0.s8 %v581
        %v583 = vlaneseq
        %v584 = vshrl.u32 %v583, 7
        %v585 = vsub.s32 %v582, %v584
        %v586 = vrot.slane %v570, %v585
        %v588 = vunpack.c.l.s4 1966171168
        %v589 = vunpack.c.0.s8 %v588
        %v590 = vlaneseq
        %v591 = vshrl.u32 %v590, 7
        %v592 = vsub.s32 %v589, %v591
        %v593 = vrot.slane %v571, %v592
        %v595 = vunpack.c.l.s4 1966171168
        %v596 = vunpack.c.0.s8 %v595
        %v597 = vlaneseq
        %v598 = vshrl.u32 %v597, 7
        %v599 = vsub.s32 %v596, %v598
        %v600 = vrot.slane %v572, %v599
        %v601 = vcombine.high %v579, %v579
        %v602 = vcombine.high %v586, %v586
        %v603 = vcombine.high %v593, %v593
        %v604 = vcombine.high %v600, %v600
        %v605 = vunpack.c.l.bf16 %v530
        %v606 = vunpack.c.l.bf16 %v531
        %v607 = vunpack.c.l.bf16 %v532
        %v608 = vunpack.c.l.bf16 %v533
        %v609 = vunpack.c.l.bf16 %v534
        %v610 = vunpack.c.l.bf16 %v535
        %v611 = vunpack.c.l.bf16 %v536
        %v612 = vunpack.c.l.bf16 %v537
        %v613 = vlaneseq
        %v614 = vshrl.u32 %v613, 7
        %v615 = vsub.s32 0, %v614
        %v616 = vrot.slane %v579, %v615
        %v617 = vlaneseq
        %v618 = vshrl.u32 %v617, 7
        %v619 = vsub.s32 0, %v618
        %v620 = vrot.slane %v593, %v619
        %v621 = vlaneseq
        %v622 = vshrl.u32 %v621, 7
        %v623 = vsub.s32 0, %v622
        %v624 = vrot.slane %v601, %v623
        %v625 = vlaneseq
        %v626 = vshrl.u32 %v625, 7
        %v627 = vsub.s32 0, %v626
        %v628 = vrot.slane %v603, %v627
        %v629 = vlaneseq
        %v630 = vshrl.u32 %v629, 7
        %v631 = vsub.s32 0, %v630
        %v632 = vrot.slane %v586, %v631
        %v633 = vlaneseq
        %v634 = vshrl.u32 %v633, 7
        %v635 = vsub.s32 0, %v634
        %v636 = vrot.slane %v600, %v635
        %v637 = vlaneseq
        %v638 = vshrl.u32 %v637, 7
        %v639 = vsub.s32 0, %v638
        %v640 = vrot.slane %v602, %v639
        %v641 = vlaneseq
        %v642 = vshrl.u32 %v641, 7
        %v643 = vsub.s32 0, %v642
        %v644 = vrot.slane %v604, %v643
        %v653 = vmul.f32 %v605, %v616
        %v654 = vmul.f32 %v606, %v620
        %v655 = vmul.f32 %v607, %v624
        %v656 = vmul.f32 %v608, %v628
        %v657 = vmul.f32 %v609, %v632
        %v658 = vmul.f32 %v610, %v636
        %v659 = vmul.f32 %v611, %v640
        %v660 = vmul.f32 %v612, %v644
        %vm661 = vcmask 130048
        %v662 = vsel %vm661, %v653, 0.0
        %663 = vadd.xlane.f32.xlu0 %v662
        %v664 = vpop.xlane.xlu0 %663
        %v665 = vsel %vm661, %v654, 0.0
        %666 = vadd.xlane.f32.xlu0 %v665
        %v667 = vpop.xlane.xlu0 %666
        %v668 = vsel %vm661, %v655, 0.0
        %669 = vadd.xlane.f32.xlu0 %v668
        %v670 = vpop.xlane.xlu0 %669
        %v671 = vsel %vm661, %v656, 0.0
        %672 = vadd.xlane.f32.xlu0 %v671
        %v673 = vpop.xlane.xlu0 %672
        %v674 = vsel %vm661, %v657, 0.0
        %675 = vadd.xlane.f32.xlu0 %v674
        %v676 = vpop.xlane.xlu0 %675
        %v677 = vsel %vm661, %v658, 0.0
        %678 = vadd.xlane.f32.xlu0 %v677
        %v679 = vpop.xlane.xlu0 %678
        %v680 = vsel %vm661, %v659, 0.0
        %681 = vadd.xlane.f32.xlu0 %v680
        %v682 = vpop.xlane.xlu0 %681
        %v683 = vsel %vm661, %v660, 0.0
        %684 = vadd.xlane.f32.xlu0 %v683
        %v685 = vpop.xlane.xlu0 %684
        %v694 = vlaneseq
        %v695 = vand.u32 %v694, 127
        %v696 = vlaneseq
        %v697 = vshrl.u32 %v696, 7
        %v698 = vsub.s32 %v695, %v697
        %v699 = vrot.slane %v664, %v698
        %v700 = vlaneseq
        %v701 = vshrl.u32 %v700, 7
        %v702 = vsub.s32 %v695, %v701
        %v703 = vrot.slane %v667, %v702
        %v704 = vlaneseq
        %v705 = vshrl.u32 %v704, 7
        %v706 = vsub.s32 %v695, %v705
        %v707 = vrot.slane %v670, %v706
        %v708 = vlaneseq
        %v709 = vshrl.u32 %v708, 7
        %v710 = vsub.s32 %v695, %v709
        %v711 = vrot.slane %v673, %v710
        %v712 = vlaneseq
        %v713 = vshrl.u32 %v712, 7
        %v714 = vsub.s32 %v695, %v713
        %v715 = vrot.slane %v676, %v714
        %v716 = vlaneseq
        %v717 = vshrl.u32 %v716, 7
        %v718 = vsub.s32 %v695, %v717
        %v719 = vrot.slane %v679, %v718
        %v720 = vlaneseq
        %v721 = vshrl.u32 %v720, 7
        %v722 = vsub.s32 %v695, %v721
        %v723 = vrot.slane %v682, %v722
        %v724 = vlaneseq
        %v725 = vshrl.u32 %v724, 7
        %v726 = vsub.s32 %v695, %v725
        %v727 = vrot.slane %v685, %v726
        %vm728 = vcmask 1041409
        %v729 = vsel %vm728, %v703, %v699
        %vm730 = vcmask 1042434
        %v731 = vsel %vm730, %v707, %v729
        %vm732 = vcmask 1043459
        %v733 = vsel %vm732, %v711, %v731
        %vm734 = vcmask 1044484
        %v735 = vsel %vm734, %v715, %v733
        %vm736 = vcmask 1045509
        %v737 = vsel %vm736, %v719, %v735
        %vm738 = vcmask 1046534
        %v739 = vsel %vm738, %v723, %v737
        %vm740 = vcmask 1047559
        %v741 = vsel %vm740, %v727, %v739
        %v744 = vsel %vm661, %v527, 0
        %v747 = vsel %vm661, %v528, 0
        %749 = vmatprep.subr.bf16.mxu0 0
        %750 = vmatpush1.bf16.xpose.msra.mxu0 %v747
        %751 = vmatprep.subr.bf16.mxu0 0
        %752 = vmatpush1.bf16.xpose.msra.mxu0 0
        %753 = vmatprep.subr.bf16.mxu0 0
        %754 = vmatpush1.bf16.xpose.msra.mxu0 0
        %755 = vmatprep.subr.bf16.mxu0 0
        %756 = vmatpush1.bf16.xpose.msra.mxu0 0
        %757 = vmatprep.subr.bf16.mxu0 0
        %758 = vmatpush1.bf16.xpose.msra.mxu0 0
        %759 = vmatprep.subr.bf16.mxu0 0
        %760 = vmatpush1.bf16.xpose.msra.mxu0 0
        %761 = vmatprep.subr.bf16.mxu0 0
        %762 = vmatpush1.bf16.xpose.msra.mxu0 0
        %763 = vmatprep.subr.bf16.mxu0 0
        %764 = vmatpush1.bf16.xpose.msra.mxu0 0
        %765 = vmatprep.subr.bf16.mxu0 0
        %766 = vmatpush1.bf16.xpose.msra.mxu0 0
        %767 = vmatprep.subr.bf16.mxu0 0
        %768 = vmatpush1.bf16.xpose.msra.mxu0 0
        %769 = vmatprep.subr.bf16.mxu0 0
        %770 = vmatpush1.bf16.xpose.msra.mxu0 0
        %771 = vmatprep.subr.bf16.mxu0 0
        %772 = vmatpush1.bf16.xpose.msra.mxu0 0
        %773 = vmatprep.subr.bf16.mxu0 0
        %774 = vmatpush1.bf16.xpose.msra.mxu0 0
        %775 = vmatprep.subr.bf16.mxu0 0
        %776 = vmatpush1.bf16.xpose.msra.mxu0 0
        %777 = vmatprep.subr.bf16.mxu0 0
        %778 = vmatpush1.bf16.xpose.msra.mxu0 0
        %779 = vmatprep.subr.bf16.mxu0 0
        %780 = vmatpush1.bf16.xpose.msra.mxu0 0
        %781 = vmatprep.mubr.bf16.mxu0 0
        %782 = vmatmul.mubr.bf16.gmra.mrb[0].mxu0 %v744
        %v783 = vpop.f32.mrb[0].mxu0
        %v784 = vadd.f32 %v741, %v783
        %v785 = vpop.f32.mrb[0].mxu0
        %v786 = vpop.f32.mrb[0].mxu0
        %v787 = vpop.f32.mrb[0].mxu0
        %788 = vdwg.mxu0
        %v789 = vadd.f32 %v784, %v554
        %vm790 = vcmask 64512
        %v791 = vsel %vm790, %v789, -inf
        %792 = vmax.xlane.f32.xlu0 %v791
        %v793 = vpop.xlane.xlu0 %792
        %v794 = vsub.f32 %v789, %v793
        %v795 = vmul.f32 %v794, 1.442695
        %v796 = vpow.pop %v795
        %v797 = vsel %vm790, %v796, 0.0
        %798 = vadd.xlane.f32.xlu0 %v797
        %v799 = vpop.xlane.xlu0 %798
        %v800 = vrcp.pop %v799
        %v801 = vmul.f32 %v799, %v800
        %v802 = vsub.f32 2.0, %v801
        %v803 = vmul.f32 %v800, %v802
        %v804 = vmul.f32 %v796, %v803
        %805 = vst.msk [vmem:[%s513] sm:$0xff] %vm790, %v804
        %v806 = vpack.c.bf16 %v804, %v804
        %v807 = vlaneseq
        %v808 = vshrl.u32 %v807, 7
        %v809 = vsub.s32 0, %v808
        %v810 = vrot.slane %v804, %v809
        %812 = vbcast.lane.b32.xlu0 %v810, 256
        %v813 = vpop.permute.xlu0 %812
        %v814 = vlaneseq
        %v815 = vshrl.u32 %v814, 7
        %v816 = vsub.s32 1, %v815
        %v817 = vrot.slane %v804, %v816
        %819 = vbcast.lane.b32.xlu0 %v817, 256
        %v820 = vpop.permute.xlu0 %819
        %v821 = vlaneseq
        %v822 = vshrl.u32 %v821, 7
        %v823 = vsub.s32 2, %v822
        %v824 = vrot.slane %v804, %v823
        %826 = vbcast.lane.b32.xlu0 %v824, 256
        %v827 = vpop.permute.xlu0 %826
        %v828 = vlaneseq
        %v829 = vshrl.u32 %v828, 7
        %v830 = vsub.s32 3, %v829
        %v831 = vrot.slane %v804, %v830
        %833 = vbcast.lane.b32.xlu0 %v831, 256
        %v834 = vpop.permute.xlu0 %833
        %v835 = vlaneseq
        %v836 = vshrl.u32 %v835, 7
        %v837 = vsub.s32 4, %v836
        %v838 = vrot.slane %v804, %v837
        %840 = vbcast.lane.b32.xlu0 %v838, 256
        %v841 = vpop.permute.xlu0 %840
        %v842 = vlaneseq
        %v843 = vshrl.u32 %v842, 7
        %v844 = vsub.s32 5, %v843
        %v845 = vrot.slane %v804, %v844
        %847 = vbcast.lane.b32.xlu0 %v845, 256
        %v848 = vpop.permute.xlu0 %847
        %v849 = vlaneseq
        %v850 = vshrl.u32 %v849, 7
        %v851 = vsub.s32 6, %v850
        %v852 = vrot.slane %v804, %v851
        %854 = vbcast.lane.b32.xlu0 %v852, 256
        %v855 = vpop.permute.xlu0 %854
        %v856 = vlaneseq
        %v857 = vshrl.u32 %v856, 7
        %v858 = vsub.s32 7, %v857
        %v859 = vrot.slane %v804, %v858
        %861 = vbcast.lane.b32.xlu0 %v859, 256
        %v862 = vpop.permute.xlu0 %861
        %v863 = vunpack.c.l.bf16 %v538
        %v864 = vunpack.c.l.bf16 %v539
        %v865 = vunpack.c.l.bf16 %v540
        %v866 = vunpack.c.l.bf16 %v541
        %v867 = vunpack.c.l.bf16 %v542
        %v868 = vunpack.c.l.bf16 %v543
        %v869 = vunpack.c.l.bf16 %v544
        %v870 = vunpack.c.l.bf16 %v545
        %v871 = vmul.f32 %v813, %v863
        %v872 = vmul.f32 %v820, %v864
        %v873 = vmul.f32 %v827, %v865
        %v874 = vmul.f32 %v834, %v866
        %v875 = vmul.f32 %v841, %v867
        %v876 = vmul.f32 %v848, %v868
        %v877 = vmul.f32 %v855, %v869
        %v878 = vmul.f32 %v862, %v870
        %v879 = vsel %vm661, %v871, 0.0
        %v880 = vrot.slane %v879, 4
        %v881 = vadd.f32 %v879, %v880
        %v882 = vrot.slane %v881, 2
        %v883 = vadd.f32 %v881, %v882
        %v884 = vrot.slane %v883, 1
        %v885 = vadd.f32 %v883, %v884
        %v886 = vsel %vm661, %v872, 0.0
        %v887 = vrot.slane %v886, 4
        %v888 = vadd.f32 %v886, %v887
        %v889 = vrot.slane %v888, 2
        %v890 = vadd.f32 %v888, %v889
        %v891 = vrot.slane %v890, 1
        %v892 = vadd.f32 %v890, %v891
        %v893 = vsel %vm661, %v873, 0.0
        %v894 = vrot.slane %v893, 4
        %v895 = vadd.f32 %v893, %v894
        %v896 = vrot.slane %v895, 2
        %v897 = vadd.f32 %v895, %v896
        %v898 = vrot.slane %v897, 1
        %v899 = vadd.f32 %v897, %v898
        %v900 = vsel %vm661, %v874, 0.0
        %v901 = vrot.slane %v900, 4
        %v902 = vadd.f32 %v900, %v901
        %v903 = vrot.slane %v902, 2
        %v904 = vadd.f32 %v902, %v903
        %v905 = vrot.slane %v904, 1
        %v906 = vadd.f32 %v904, %v905
        %v907 = vsel %vm661, %v875, 0.0
        %v908 = vrot.slane %v907, 4
        %v909 = vadd.f32 %v907, %v908
        %v910 = vrot.slane %v909, 2
        %v911 = vadd.f32 %v909, %v910
        %v912 = vrot.slane %v911, 1
        %v913 = vadd.f32 %v911, %v912
        %v914 = vsel %vm661, %v876, 0.0
        %v915 = vrot.slane %v914, 4
        %v916 = vadd.f32 %v914, %v915
        %v917 = vrot.slane %v916, 2
        %v918 = vadd.f32 %v916, %v917
        %v919 = vrot.slane %v918, 1
        %v920 = vadd.f32 %v918, %v919
        %v921 = vsel %vm661, %v877, 0.0
        %v922 = vrot.slane %v921, 4
        %v923 = vadd.f32 %v921, %v922
        %v924 = vrot.slane %v923, 2
        %v925 = vadd.f32 %v923, %v924
        %v926 = vrot.slane %v925, 1
        %v927 = vadd.f32 %v925, %v926
        %v928 = vsel %vm661, %v878, 0.0
        %v929 = vrot.slane %v928, 4
        %v930 = vadd.f32 %v928, %v929
        %v931 = vrot.slane %v930, 2
        %v932 = vadd.f32 %v930, %v931
        %v933 = vrot.slane %v932, 1
        %v934 = vadd.f32 %v932, %v933
        %v943 = vsel %vm728, %v892, %v885
        %v944 = vsel %vm730, %v899, %v943
        %v945 = vsel %vm732, %v906, %v944
        %v946 = vsel %vm734, %v913, %v945
        %v947 = vsel %vm736, %v920, %v946
        %v948 = vsel %vm738, %v927, %v947
        %v949 = vsel %vm740, %v934, %v948
        %v952 = vsel %vm790, %v806, 0
        %vm954 = vcmask 1043456
        %v956 = vsel %vm954, %v529, 0
        %958 = vmatprep.subr.bf16.mxu0 0
        %959 = vmatpush1.bf16.msra.mxu0 %v956
        %960 = vmatprep.subr.bf16.mxu0 0
        %961 = vmatpush1.bf16.msra.mxu0 0
        %962 = vmatprep.subr.bf16.mxu0 0
        %963 = vmatpush1.bf16.msra.mxu0 0
        %964 = vmatprep.subr.bf16.mxu0 0
        %965 = vmatpush1.bf16.msra.mxu0 0
        %966 = vmatprep.subr.bf16.mxu0 0
        %967 = vmatpush1.bf16.msra.mxu0 0
        %968 = vmatprep.subr.bf16.mxu0 0
        %969 = vmatpush1.bf16.msra.mxu0 0
        %970 = vmatprep.subr.bf16.mxu0 0
        %971 = vmatpush1.bf16.msra.mxu0 0
        %972 = vmatprep.subr.bf16.mxu0 0
        %973 = vmatpush1.bf16.msra.mxu0 0
        %974 = vmatprep.subr.bf16.mxu0 0
        %975 = vmatpush1.bf16.msra.mxu0 0
        %976 = vmatprep.subr.bf16.mxu0 0
        %977 = vmatpush1.bf16.msra.mxu0 0
        %978 = vmatprep.subr.bf16.mxu0 0
        %979 = vmatpush1.bf16.msra.mxu0 0
        %980 = vmatprep.subr.bf16.mxu0 0
        %981 = vmatpush1.bf16.msra.mxu0 0
        %982 = vmatprep.subr.bf16.mxu0 0
        %983 = vmatpush1.bf16.msra.mxu0 0
        %984 = vmatprep.subr.bf16.mxu0 0
        %985 = vmatpush1.bf16.msra.mxu0 0
        %986 = vmatprep.subr.bf16.mxu0 0
        %987 = vmatpush1.bf16.msra.mxu0 0
        %988 = vmatprep.subr.bf16.mxu0 0
        %989 = vmatpush1.bf16.msra.mxu0 0
        %990 = vmatprep.mubr.bf16.mxu0 0
        %991 = vmatmul.mubr.bf16.gmra.mrb[0].mxu0 %v952
        %v992 = vpop.f32.mrb[0].mxu0
        %v993 = vadd.f32 %v949, %v992
        %v994 = vpop.f32.mrb[0].mxu0
        %v995 = vpop.f32.mrb[0].mxu0
        %v996 = vpop.f32.mrb[0].mxu0
        %997 = vdwg.mxu0
        %1006 = vrot.lane.b32.xlu0 %v653, 112
        %v1007 = vpop.permute.xlu0 %1006
        %1008 = vrot.lane.b32.xlu0 %v654, 112
        %v1009 = vpop.permute.xlu0 %1008
        %1010 = vrot.lane.b32.xlu0 %v655, 112
        %v1011 = vpop.permute.xlu0 %1010
        %1012 = vrot.lane.b32.xlu0 %v656, 112
        %v1013 = vpop.permute.xlu0 %1012
        %1014 = vrot.lane.b32.xlu0 %v657, 112
        %v1015 = vpop.permute.xlu0 %1014
        %1016 = vrot.lane.b32.xlu0 %v658, 112
        %v1017 = vpop.permute.xlu0 %1016
        %1018 = vrot.lane.b32.xlu0 %v659, 112
        %v1019 = vpop.permute.xlu0 %1018
        %1020 = vrot.lane.b32.xlu0 %v660, 112
        %v1021 = vpop.permute.xlu0 %1020
        %v1030 = vsel %vm661, %v1007, 0.0
        %1031 = vadd.xlane.f32.xlu0 %v1030
        %v1032 = vpop.xlane.xlu0 %1031
        %v1033 = vsel %vm661, %v1009, 0.0
        %1034 = vadd.xlane.f32.xlu0 %v1033
        %v1035 = vpop.xlane.xlu0 %1034
        %v1036 = vsel %vm661, %v1011, 0.0
        %1037 = vadd.xlane.f32.xlu0 %v1036
        %v1038 = vpop.xlane.xlu0 %1037
        %v1039 = vsel %vm661, %v1013, 0.0
        %1040 = vadd.xlane.f32.xlu0 %v1039
        %v1041 = vpop.xlane.xlu0 %1040
        %v1042 = vsel %vm661, %v1015, 0.0
        %1043 = vadd.xlane.f32.xlu0 %v1042
        %v1044 = vpop.xlane.xlu0 %1043
        %v1045 = vsel %vm661, %v1017, 0.0
        %1046 = vadd.xlane.f32.xlu0 %v1045
        %v1047 = vpop.xlane.xlu0 %1046
        %v1048 = vsel %vm661, %v1019, 0.0
        %1049 = vadd.xlane.f32.xlu0 %v1048
        %v1050 = vpop.xlane.xlu0 %1049
        %v1051 = vsel %vm661, %v1021, 0.0
        %1052 = vadd.xlane.f32.xlu0 %v1051
        %v1053 = vpop.xlane.xlu0 %1052
        %1055 = vrot.lane.b32.xlu0 %v527, 112
        %v1056 = vpop.permute.xlu0 %1055
        %v1058 = vunpack.c.l.b16 %v528
        %v1059 = vpack.c.b16 %v1058, %v1058
        %1060 = vrot.lane.b32.xlu0 %v1059, 112
        %v1061 = vpop.permute.xlu0 %1060
        %v1070 = vlaneseq
        %v1071 = vshrl.u32 %v1070, 7
        %v1072 = vsub.s32 %v695, %v1071
        %v1073 = vrot.slane %v1032, %v1072
        %v1074 = vlaneseq
        %v1075 = vshrl.u32 %v1074, 7
        %v1076 = vsub.s32 %v695, %v1075
        %v1077 = vrot.slane %v1035, %v1076
        %v1078 = vlaneseq
        %v1079 = vshrl.u32 %v1078, 7
        %v1080 = vsub.s32 %v695, %v1079
        %v1081 = vrot.slane %v1038, %v1080
        %v1082 = vlaneseq
        %v1083 = vshrl.u32 %v1082, 7
        %v1084 = vsub.s32 %v695, %v1083
        %v1085 = vrot.slane %v1041, %v1084
        %v1086 = vlaneseq
        %v1087 = vshrl.u32 %v1086, 7
        %v1088 = vsub.s32 %v695, %v1087
        %v1089 = vrot.slane %v1044, %v1088
        %v1090 = vlaneseq
        %v1091 = vshrl.u32 %v1090, 7
        %v1092 = vsub.s32 %v695, %v1091
        %v1093 = vrot.slane %v1047, %v1092
        %v1094 = vlaneseq
        %v1095 = vshrl.u32 %v1094, 7
        %v1096 = vsub.s32 %v695, %v1095
        %v1097 = vrot.slane %v1050, %v1096
        %v1098 = vlaneseq
        %v1099 = vshrl.u32 %v1098, 7
        %v1100 = vsub.s32 %v695, %v1099
        %v1101 = vrot.slane %v1053, %v1100
        %v1102 = vsel %vm728, %v1077, %v1073
        %v1103 = vsel %vm730, %v1081, %v1102
        %v1104 = vsel %vm732, %v1085, %v1103
        %v1105 = vsel %vm734, %v1089, %v1104
        %v1106 = vsel %vm736, %v1093, %v1105
        %v1107 = vsel %vm738, %v1097, %v1106
        %v1108 = vsel %vm740, %v1101, %v1107
        %v1111 = vsel %vm661, %v1056, 0
        %v1114 = vsel %vm661, %v1061, 0
        %1116 = vmatprep.subr.bf16.mxu0 0
        %1117 = vmatpush1.bf16.xpose.msra.mxu0 %v1114
        %1118 = vmatprep.subr.bf16.mxu0 0
        %1119 = vmatpush1.bf16.xpose.msra.mxu0 0
        %1120 = vmatprep.subr.bf16.mxu0 0
        %1121 = vmatpush1.bf16.xpose.msra.mxu0 0
        %1122 = vmatprep.subr.bf16.mxu0 0
        %1123 = vmatpush1.bf16.xpose.msra.mxu0 0
        %1124 = vmatprep.subr.bf16.mxu0 0
        %1125 = vmatpush1.bf16.xpose.msra.mxu0 0
        %1126 = vmatprep.subr.bf16.mxu0 0
        %1127 = vmatpush1.bf16.xpose.msra.mxu0 0
        %1128 = vmatprep.subr.bf16.mxu0 0
        %1129 = vmatpush1.bf16.xpose.msra.mxu0 0
        %1130 = vmatprep.subr.bf16.mxu0 0
        %1131 = vmatpush1.bf16.xpose.msra.mxu0 0
        %1132 = vmatprep.subr.bf16.mxu0 0
        %1133 = vmatpush1.bf16.xpose.msra.mxu0 0
        %1134 = vmatprep.subr.bf16.mxu0 0
        %1135 = vmatpush1.bf16.xpose.msra.mxu0 0
        %1136 = vmatprep.subr.bf16.mxu0 0
        %1137 = vmatpush1.bf16.xpose.msra.mxu0 0
        %1138 = vmatprep.subr.bf16.mxu0 0
        %1139 = vmatpush1.bf16.xpose.msra.mxu0 0
        %1140 = vmatprep.subr.bf16.mxu0 0
        %1141 = vmatpush1.bf16.xpose.msra.mxu0 0
        %1142 = vmatprep.subr.bf16.mxu0 0
        %1143 = vmatpush1.bf16.xpose.msra.mxu0 0
        %1144 = vmatprep.subr.bf16.mxu0 0
        %1145 = vmatpush1.bf16.xpose.msra.mxu0 0
        %1146 = vmatprep.subr.bf16.mxu0 0
        %1147 = vmatpush1.bf16.xpose.msra.mxu0 0
        %1148 = vmatprep.mubr.bf16.mxu0 0
        %1149 = vmatmul.mubr.bf16.gmra.mrb[0].mxu0 %v1111
        %v1150 = vpop.f32.mrb[0].mxu0
        %v1151 = vadd.f32 %v1108, %v1150
        %v1152 = vpop.f32.mrb[0].mxu0
        %v1153 = vpop.f32.mrb[0].mxu0
        %v1154 = vpop.f32.mrb[0].mxu0
        %1155 = vdwg.mxu0
        %v1156 = vadd.f32 %v1151, %v554
        %v1157 = vsel %vm790, %v1156, -inf
        %1158 = vmax.xlane.f32.xlu0 %v1157
        %v1159 = vpop.xlane.xlu0 %1158
        %v1160 = vsub.f32 %v1156, %v1159
        %v1161 = vmul.f32 %v1160, 1.442695
        %v1162 = vpow.pop %v1161
        %v1163 = vsel %vm790, %v1162, 0.0
        %1164 = vadd.xlane.f32.xlu0 %v1163
        %v1165 = vpop.xlane.xlu0 %1164
        %v1166 = vrcp.pop %v1165
        %v1167 = vmul.f32 %v1165, %v1166
        %v1168 = vsub.f32 2.0, %v1167
        %v1169 = vmul.f32 %v1166, %v1168
        %v1170 = vmul.f32 %v1162, %v1169
        %s1171 = scalar_lea.vmem %s513, 8 [#allocation12]
        %1172 = vst.msk [vmem:[%s1171] sm:$0xff] %vm790, %v1170
        %v1173 = vpack.c.bf16 %v1170, %v1170
        %v1174 = vlaneseq
        %v1175 = vshrl.u32 %v1174, 7
        %v1176 = vsub.s32 0, %v1175
        %v1177 = vrot.slane %v1170, %v1176
        %1179 = vbcast.lane.b32.xlu0 %v1177, 256
        %v1180 = vpop.permute.xlu0 %1179
        %v1181 = vlaneseq
        %v1182 = vshrl.u32 %v1181, 7
        %v1183 = vsub.s32 1, %v1182
        %v1184 = vrot.slane %v1170, %v1183
        %1186 = vbcast.lane.b32.xlu0 %v1184, 256
        %v1187 = vpop.permute.xlu0 %1186
        %v1188 = vlaneseq
        %v1189 = vshrl.u32 %v1188, 7
        %v1190 = vsub.s32 2, %v1189
        %v1191 = vrot.slane %v1170, %v1190
        %1193 = vbcast.lane.b32.xlu0 %v1191, 256
        %v1194 = vpop.permute.xlu0 %1193
        %v1195 = vlaneseq
        %v1196 = vshrl.u32 %v1195, 7
        %v1197 = vsub.s32 3, %v1196
        %v1198 = vrot.slane %v1170, %v1197
        %1200 = vbcast.lane.b32.xlu0 %v1198, 256
        %v1201 = vpop.permute.xlu0 %1200
        %v1202 = vlaneseq
        %v1203 = vshrl.u32 %v1202, 7
        %v1204 = vsub.s32 4, %v1203
        %v1205 = vrot.slane %v1170, %v1204
        %1207 = vbcast.lane.b32.xlu0 %v1205, 256
        %v1208 = vpop.permute.xlu0 %1207
        %v1209 = vlaneseq
        %v1210 = vshrl.u32 %v1209, 7
        %v1211 = vsub.s32 5, %v1210
        %v1212 = vrot.slane %v1170, %v1211
        %1214 = vbcast.lane.b32.xlu0 %v1212, 256
        %v1215 = vpop.permute.xlu0 %1214
        %v1216 = vlaneseq
        %v1217 = vshrl.u32 %v1216, 7
        %v1218 = vsub.s32 6, %v1217
        %v1219 = vrot.slane %v1170, %v1218
        %1221 = vbcast.lane.b32.xlu0 %v1219, 256
        %v1222 = vpop.permute.xlu0 %1221
        %v1223 = vlaneseq
        %v1224 = vshrl.u32 %v1223, 7
        %v1225 = vsub.s32 7, %v1224
        %v1226 = vrot.slane %v1170, %v1225
        %1228 = vbcast.lane.b32.xlu0 %v1226, 256
        %v1229 = vpop.permute.xlu0 %1228
        %v1230 = vmul.f32 %v1180, %v863
        %v1231 = vmul.f32 %v1187, %v864
        %v1232 = vmul.f32 %v1194, %v865
        %v1233 = vmul.f32 %v1201, %v866
        %v1234 = vmul.f32 %v1208, %v867
        %v1235 = vmul.f32 %v1215, %v868
        %v1236 = vmul.f32 %v1222, %v869
        %v1237 = vmul.f32 %v1229, %v870
        %vm1238 = vcmask 261248
        %v1239 = vsel %vm1238, %v1230, 0.0
        %v1240 = vrot.slane %v1239, 4
        %v1241 = vadd.f32 %v1239, %v1240
        %v1242 = vrot.slane %v1241, 2
        %v1243 = vadd.f32 %v1241, %v1242
        %v1244 = vrot.slane %v1243, 1
        %v1245 = vadd.f32 %v1243, %v1244
        %v1246 = vsel %vm1238, %v1231, 0.0
        %v1247 = vrot.slane %v1246, 4
        %v1248 = vadd.f32 %v1246, %v1247
        %v1249 = vrot.slane %v1248, 2
        %v1250 = vadd.f32 %v1248, %v1249
        %v1251 = vrot.slane %v1250, 1
        %v1252 = vadd.f32 %v1250, %v1251
        %v1253 = vsel %vm1238, %v1232, 0.0
        %v1254 = vrot.slane %v1253, 4
        %v1255 = vadd.f32 %v1253, %v1254
        %v1256 = vrot.slane %v1255, 2
        %v1257 = vadd.f32 %v1255, %v1256
        %v1258 = vrot.slane %v1257, 1
        %v1259 = vadd.f32 %v1257, %v1258
        %v1260 = vsel %vm1238, %v1233, 0.0
        %v1261 = vrot.slane %v1260, 4
        %v1262 = vadd.f32 %v1260, %v1261
        %v1263 = vrot.slane %v1262, 2
        %v1264 = vadd.f32 %v1262, %v1263
        %v1265 = vrot.slane %v1264, 1
        %v1266 = vadd.f32 %v1264, %v1265
        %v1267 = vsel %vm1238, %v1234, 0.0
        %v1268 = vrot.slane %v1267, 4
        %v1269 = vadd.f32 %v1267, %v1268
        %v1270 = vrot.slane %v1269, 2
        %v1271 = vadd.f32 %v1269, %v1270
        %v1272 = vrot.slane %v1271, 1
        %v1273 = vadd.f32 %v1271, %v1272
        %v1274 = vsel %vm1238, %v1235, 0.0
        %v1275 = vrot.slane %v1274, 4
        %v1276 = vadd.f32 %v1274, %v1275
        %v1277 = vrot.slane %v1276, 2
        %v1278 = vadd.f32 %v1276, %v1277
        %v1279 = vrot.slane %v1278, 1
        %v1280 = vadd.f32 %v1278, %v1279
        %v1281 = vsel %vm1238, %v1236, 0.0
        %v1282 = vrot.slane %v1281, 4
        %v1283 = vadd.f32 %v1281, %v1282
        %v1284 = vrot.slane %v1283, 2
        %v1285 = vadd.f32 %v1283, %v1284
        %v1286 = vrot.slane %v1285, 1
        %v1287 = vadd.f32 %v1285, %v1286
        %v1288 = vsel %vm1238, %v1237, 0.0
        %v1289 = vrot.slane %v1288, 4
        %v1290 = vadd.f32 %v1288, %v1289
        %v1291 = vrot.slane %v1290, 2
        %v1292 = vadd.f32 %v1290, %v1291
        %v1293 = vrot.slane %v1292, 1
        %v1294 = vadd.f32 %v1292, %v1293
        %v1296 = vunpack.c.l.b16 %v529
        %v1297 = vpack.c.b16 %v1296, %v1296
        %1298 = vrot.lane.b32.xlu0 %v1297, 112
        %v1299 = vpop.permute.xlu0 %1298
        %v1308 = vsel %vm728, %v1252, %v1245
        %v1309 = vsel %vm730, %v1259, %v1308
        %v1310 = vsel %vm732, %v1266, %v1309
        %v1311 = vsel %vm734, %v1273, %v1310
        %v1312 = vsel %vm736, %v1280, %v1311
        %v1313 = vsel %vm738, %v1287, %v1312
        %v1314 = vsel %vm740, %v1294, %v1313
        %1315 = vrot.lane.b32.xlu0 %v1314, 112
        %v1316 = vpop.permute.xlu0 %1315
        %v1319 = vsel %vm790, %v1173, 0
        %v1322 = vsel %vm954, %v1299, 0
        %1324 = vmatprep.subr.bf16.mxu0 0
        %1325 = vmatpush1.bf16.msra.mxu0 %v1322
        %1326 = vmatprep.subr.bf16.mxu0 0
        %1327 = vmatpush1.bf16.msra.mxu0 0
        %1328 = vmatprep.subr.bf16.mxu0 0
        %1329 = vmatpush1.bf16.msra.mxu0 0
        %1330 = vmatprep.subr.bf16.mxu0 0
        %1331 = vmatpush1.bf16.msra.mxu0 0
        %1332 = vmatprep.subr.bf16.mxu0 0
        %1333 = vmatpush1.bf16.msra.mxu0 0
        %1334 = vmatprep.subr.bf16.mxu0 0
        %1335 = vmatpush1.bf16.msra.mxu0 0
        %1336 = vmatprep.subr.bf16.mxu0 0
        %1337 = vmatpush1.bf16.msra.mxu0 0
        %1338 = vmatprep.subr.bf16.mxu0 0
        %1339 = vmatpush1.bf16.msra.mxu0 0
        %1340 = vmatprep.subr.bf16.mxu0 0
        %1341 = vmatpush1.bf16.msra.mxu0 0
        %1342 = vmatprep.subr.bf16.mxu0 0
        %1343 = vmatpush1.bf16.msra.mxu0 0
        %1344 = vmatprep.subr.bf16.mxu0 0
        %1345 = vmatpush1.bf16.msra.mxu0 0
        %1346 = vmatprep.subr.bf16.mxu0 0
        %1347 = vmatpush1.bf16.msra.mxu0 0
        %1348 = vmatprep.subr.bf16.mxu0 0
        %1349 = vmatpush1.bf16.msra.mxu0 0
        %1350 = vmatprep.subr.bf16.mxu0 0
        %1351 = vmatpush1.bf16.msra.mxu0 0
        %1352 = vmatprep.subr.bf16.mxu0 0
        %1353 = vmatpush1.bf16.msra.mxu0 0
        %1354 = vmatprep.subr.bf16.mxu0 0
        %1355 = vmatpush1.bf16.msra.mxu0 0
        %1356 = vmatprep.mubr.bf16.mxu0 0
        %1357 = vmatmul.mubr.bf16.gmra.mrb[0].mxu0 %v1319
        %v1358 = vpop.f32.mrb[0].mxu0
        %v1359 = vadd.f32 %v1316, %v1358
        %v1360 = vpop.f32.mrb[0].mxu0
        %v1361 = vpop.f32.mrb[0].mxu0
        %v1362 = vpop.f32.mrb[0].mxu0
        %1363 = vdwg.mxu0
        %1365 = vrot.lane.b32.xlu0 %v1359, 16
        %v1366 = vpop.permute.xlu0 %1365
        %v1368 = vsel %vm661, %v993, %v1366
        %vm1369 = vcmask 261120
        %1370 = vst.msk [vmem:[%s506] sm:$0xff] %vm1369, %v1368
        %s1371 = sand.u32 %s243, 1
        %s1372 = scalar_lea.sflag [#allocation4], %s1371
        %s1373 = sand.u32 %s243, 1
        %s1374 = smul.addr %s1373, 8
        %s1375 = scalar_lea.vmem [#allocation11], %s1374
        %s1376 = sand.u32 %s271, 1
        %s1377 = scalar_lea.sflag [#allocation13], %s1376
        %s1378 = sand.u32 %s271, 1
        %s1379 = smul.addr %s1378, 16
        %s1380 = scalar_lea.vmem [#allocation12], %s1379
        // Predicated region
        $region69: #{tpu_custom_call.1} parent=47 // pred_check
          %p1381 = pneg %p253
        $region70: #{tpu_custom_call.1} parent=47 // pred_check_branch
          %1383 = sbr.rel (%p1381) target = $region72
        $region71: #{tpu_custom_call.1} parent=47 // pred_region
          %s1385 = ssub.s32 128, 128
          %1386 = vsyncadd %s1372, %s1385
          %s1387 = sadd.s32 %s38, %s37
          %s1388 = smul.addr %s1387, 128
          %s1389 = scalar_lea.hbm %s7, %s1388
          %s1391 = sshll.u32 %s1375, 4
          %s1392 = int_to_ptr.vmem [resolvable:$true] %s1391
          %1394 = dma.vmem_to_hbm [thread:$0]  %s1392, 128, %s1389, %s1372
        $region72: #{tpu_custom_call.1} parent=47 // pred_fallthru
          _
        // Predicated region
        $region73: #{tpu_custom_call.1} parent=47 // pred_check
          %p1395 = pneg %p281
        $region74: #{tpu_custom_call.1} parent=47 // pred_check_branch
          %1397 = sbr.rel (%p1395) target = $region76
        $region75: #{tpu_custom_call.1} parent=47 // pred_region
          %s1399 = ssub.s32 256, 256
          %1400 = vsyncadd %s1377, %s1399
          %s1401 = smul.addr %s37, 2
          %s1402 = sadd.s32 %s38, %s1401
          %s1403 = smul.addr %s1402, 128
          %s1404 = scalar_lea.hbm %s8, %s1403
          %s1405 = sshll.u32 %s1380, 4
          %s1406 = int_to_ptr.vmem [resolvable:$true] %s1405
          %1411 = dma.vmem_to_hbm [thread:$0]  %s1406, 256, %s1404, %s1377, 128, 128, 8
        $region76: #{tpu_custom_call.1} parent=47 // pred_fallthru
          _
      $region48: #{tpu_custom_call.1} parent=5 // pred_fallthru
        _
      %p1412 = scmp.le.s32.totalorder 2, %s28
      // Predicated region
      $region77: #{tpu_custom_call.1} parent=5 // pred_check
        %p1413 = pneg %p1412
      $region78: #{tpu_custom_call.1} parent=5 // pred_check_branch
        %1415 = sbr.rel (%p1413) target = $region80
      $region79: #{tpu_custom_call.1} parent=5 // pred_region
        %s1416 = ssub.s32 %s28, 2
        // Predicated region
        $region81: #{tpu_custom_call.1} parent=79 // pred_check
          %p1417 = pneg %p259
        $region82: #{tpu_custom_call.1} parent=79 // pred_check_branch
          %1419 = sbr.rel (%p1417) target = $region84
        $region83: #{tpu_custom_call.1} parent=79 // pred_region
          %s1420 = sand.u32 %s244, 1
          %s1421 = scalar_lea.sflag [#allocation4], %s1420
          %s1422 = sand.u32 %s244, 1
          %s1423 = smul.addr %s1422, 8
          %s1424 = scalar_lea.vmem [#allocation11], %s1423
          %1425 = dma.done %s1421, 128
        $region84: #{tpu_custom_call.1} parent=79 // pred_fallthru
          _
        // Predicated region
        $region85: #{tpu_custom_call.1} parent=79 // pred_check
          %p1426 = pneg %p287
        $region86: #{tpu_custom_call.1} parent=79 // pred_check_branch
          %1428 = sbr.rel (%p1426) target = $region88
        $region87: #{tpu_custom_call.1} parent=79 // pred_region
          %s1429 = sand.u32 %s272, 1
          %s1430 = scalar_lea.sflag [#allocation13], %s1429
          %s1431 = sand.u32 %s272, 1
          %s1432 = smul.addr %s1431, 16
          %s1433 = scalar_lea.vmem [#allocation12], %s1432
          %1434 = dma.done %s1430, 256
        $region88: #{tpu_custom_call.1} parent=79 // pred_fallthru
          _
      $region80: #{tpu_custom_call.1} parent=5 // pred_fallthru
        _
    $region6: #{tpu_custom_call.1} parent=1 // loop_footer
      %s32 = sadd.s32 1, %s28
    $region7: #{tpu_custom_call.1} parent=1 // loop_footer_branch
      %27 = sbr.rel target = $region3
    $region8: #{tpu_custom_call.1} parent=1 // loop_exit
      _
    %1435 = vsyncpa [#allocation3], 1
    %s1436 = scalar_lea.sflag [#allocation3], 1
    %1437 = vsyncpa %s1436, 1
    %1438 = vsyncpa [#allocation6], 1
    %s1439 = scalar_lea.sflag [#allocation6], 1
    %1440 = vsyncpa %s1439, 1
    %1441 = vsyncpa [#allocation9], 1
    %s1442 = scalar_lea.sflag [#allocation9], 1
    %1443 = vsyncpa %s1442, 1
    %1444 = vsyncpa [#allocation4], 1
    %s1445 = scalar_lea.sflag [#allocation4], 1
    %1446 = vsyncpa %s1445, 1
    %1447 = vsyncpa [#allocation13], 1
    %s1448 = scalar_lea.sflag [#allocation13], 1
    %1449 = vsyncpa %s1448, 1

</llo_original>
